<compile_context>
chip_gen: v7x
topology: tpu7x:2x2x1
jax: 0.10.0
libtpu: 0.0.40
codegen_flags: <defaults>
</compile_context>

<pallas_src>
import functools

import jax
import jax.numpy as jnp
from jax import lax
from jax.experimental import pallas as pl
from jax.experimental.pallas import tpu as pltpu


# ----------------------------------------------------------------------------
# Fused forward kernel
# ----------------------------------------------------------------------------
def fused_forward_kernel(*refs, gnn_cfgs, fc_cfgs, clip_val):
    """Whole Classifier_with_gnn forward: GNN layers + FC head, fully fused."""
    adj_ref = refs[0]                       # (N, N) int8 mask
    x_ref = refs[1]                         # (N, D_in)
    o_ref = refs[-1]                        # (N, classes)
    n_gnn = len(gnn_cfgs)
    gnn_refs = refs[2:2 + 2 * n_gnn]        # per layer: w_cat, wa_r_t
    fc_refs = refs[2 + 2 * n_gnn:-1]        # per layer: W, b

    # Additive adjacency bias built in-kernel ONCE from the int8 mask and reused
    # by every GNN layer (only O(N^2) operand in the kernel).
    adjb = jnp.where(adj_ref[...].astype(jnp.float32) > 0.0, 0.0, -1e30)

    h = x_ref[...].astype(jnp.float32)

    # ---------------- GNN (GPS-local, GAT-style) layers ----------------
    for li, (num_heads, head_dim, use_bn, use_act, use_res) in enumerate(gnn_cfgs):
        d_out = num_heads * head_dim
        w_cat = gnn_refs[2 * li][...]       # (D_in, H*Dh + H) = [W_all | W@a_l]
        wa_r_t = gnn_refs[2 * li + 1][...]  # (H, D_in)        = (W@a_r)^T

        # One wide MXU matmul: head projections z and left scores s_l together.
        proj = jnp.dot(h, w_cat, preferred_element_type=jnp.float32)   # (N, H*Dh+H)
        z = proj[:, :d_out]                                            # (N, H*Dh)
        s_l = proj[:, d_out:]                                          # (N, H)
        # Right scores directly from h (a_r pre-folded through W offline).
        s_r = lax.dot_general(wa_r_t, h, (((1,), (1,)), ((), ())),
                              preferred_element_type=jnp.float32)      # (H, N)

        head_outs = []
        # TODO(synk): switch to lax.fori_loop over heads (or a grid axis) once N is
        # large enough that H concurrent (N, N) temporaries pressure vregs/VMEM.
        for hd in range(num_heads):
            e = s_l[:, hd:hd + 1] + s_r[hd:hd + 1, :]                  # (N, N)
            e = jnp.maximum(e, 0.2 * e)                                # LeakyReLU(0.2)
            e = e + adjb                                               # adjacency mask
            m = jnp.max(e, axis=-1, keepdims=True)
            p = jnp.exp(e - m)                                         # masked -> 0
            denom = jnp.sum(p, axis=-1, keepdims=True)                 # >=1 w/ self-loops
            alpha = p * pl.reciprocal(denom, approx=True)
            zh = z[:, hd * head_dim:(hd + 1) * head_dim]
            # bf16 MXU inputs, f32 accumulation for the only O(H*N^2*Dh) matmul.
            head_outs.append(jnp.dot(alpha.astype(jnp.bfloat16),
                                     zh.astype(jnp.bfloat16),
                                     preferred_element_type=jnp.float32))
        # Lane-dense in-register concat of all heads (no partial stores, no RAW
        # through the output ref).
        h_new = jnp.concatenate(head_outs, axis=-1)                    # (N, H*Dh)

        if use_bn:
            # TODO(synk): training-mode batch statistics with gamma=1/beta=0;
            # eval-mode running stats / learned affine of BatchNorm1d not modelled.
            mean = jnp.mean(h_new, axis=0, keepdims=True)
            var = jnp.mean((h_new - mean) ** 2, axis=0, keepdims=True)
            h_new = (h_new - mean) * lax.rsqrt(var + 1e-5)
        if use_act:
            h_new = jnp.where(h_new > 0, h_new, jnp.exp(h_new) - 1.0)  # ELU
        if use_res and h.shape[-1] == d_out:
            # TODO(synk): residual only applied when dims match (no learned proj).
            h_new = h_new + h
        h = h_new

    # ---------------- FC head: (Linear + BN + ELU)* + classifier ----------------
    for fi, (use_bn, use_act) in enumerate(fc_cfgs):
        w = fc_refs[2 * fi][...]
        b = fc_refs[2 * fi + 1][...]
        h = jnp.dot(h, w, preferred_element_type=jnp.float32) + b
        if use_bn:
            mean = jnp.mean(h, axis=0, keepdims=True)
            var = jnp.mean((h - mean) ** 2, axis=0, keepdims=True)
            h = (h - mean) * lax.rsqrt(var + 1e-5)
        if use_act:
            h = jnp.where(h > 0, h, jnp.exp(h) - 1.0)                  # ELU
    if clip_val:
        h = jnp.tanh(h)

    # Single final store (output is (N, classes); lane-padding here is inherent
    # to the problem shape, not a kernel choice).
    o_ref[...] = h.astype(o_ref.dtype)


# ----------------------------------------------------------------------------
# Wrappers
# ----------------------------------------------------------------------------
def pack_gat_params(W, a_l, a_r):
    """Fold per-head params into kernel-friendly packed matrices (done once)."""
    # W: (H, D_in, Dh), a_l/a_r: (H, Dh)
    H, d_in, dh = W.shape
    w_all = jnp.transpose(W, (1, 0, 2)).reshape(d_in, H * dh)          # (D_in, H*Dh)
    wa_l = jnp.einsum("hid,hd->ih", W, a_l)                            # (D_in, H)
    wa_r_t = jnp.einsum("hid,hd->hi", W, a_r)                          # (H, D_in)
    # Merge projection + left-score matmuls into one wide matrix.
    w_cat = jnp.concatenate([w_all, wa_l], axis=1)                     # (D_in, H*Dh+H)
    return dict(w_cat=w_cat, wa_r_t=wa_r_t)


def classifier_with_gnn_forward(x, edges, node_indices, params, clip_val=False):
    """Classifier_with_gnn.forward as a single fused pallas_call."""
    del node_indices  # TODO(synk): node_indices are not used by this local-GNN variant.
    N = x.shape[0]

    # Adjacency shipped as a compact int8 mask; bias built in-kernel.
    adj_mask = (edges > 0).astype(jnp.int8)

    gnn_cfgs = tuple(
        (int(l["num_heads"]), int(l["head_dim"]), bool(l["batch_norm"]),
         True, bool(l["residual"]))
        for l in params["gnn_layers"])
    fc_cfgs = tuple((bool(bn), bool(act)) for bn, act in params["fc_cfg"])

    args = [adj_mask, x.astype(jnp.float32)]
    for l in params["gnn_layers"]:
        args += [l["packed"]["w_cat"], l["packed"]["wa_r_t"]]
    for p in params["fc_layers"]:
        args += [p["W"], p["b"]]

    classes = params["fc_layers"][-1]["W"].shape[1]
    kernel = functools.partial(fused_forward_kernel,
                               gnn_cfgs=gnn_cfgs, fc_cfgs=fc_cfgs,
                               clip_val=bool(clip_val))

    vmem_spec = pl.BlockSpec(memory_space=pltpu.MemorySpace.VMEM)
    return pl.pallas_call(
        kernel,
        out_shape=jax.ShapeDtypeStruct((N, classes), jnp.float32),
        in_specs=[vmem_spec] * len(args),
        out_specs=vmem_spec,
        # No grid: whole problem resident in VMEM at this size.
        # TODO(synk): add a ('parallel', 'arbitrary') node-row/col grid for large N.
    )(*args)


def init_params(key, cfg):
    params = {"gnn_layers": [], "fc_layers": [], "fc_cfg": []}
    in_dim = cfg["in_dim"]
    # GPS (GNN) layers.
    for latent_dim, num_heads in zip(cfg["gnn_latent_dims"], cfg["num_heads"]):
        assert latent_dim % num_heads == 0
        head_dim = latent_dim // num_heads
        key, kw, kl, kr = jax.random.split(key, 4)
        std_w = (2.0 / (in_dim + head_dim)) ** 0.5
        std_a = (2.0 / (head_dim + 1)) ** 0.5
        W = std_w * jax.random.normal(kw, (num_heads, in_dim, head_dim), jnp.float32)
        a_l = std_a * jax.random.normal(kl, (num_heads, head_dim), jnp.float32)
        a_r = std_a * jax.random.normal(kr, (num_heads, head_dim), jnp.float32)
        params["gnn_layers"].append(dict(
            packed=pack_gat_params(W, a_l, a_r),
            num_heads=num_heads, head_dim=head_dim,
            batch_norm=cfg["batch_norm"], residual=cfg["residual"]))
        in_dim = latent_dim
    # FC layers (Linear + norm + act).
    for latent_dim in cfg["latent_dims"]:
        key, kw = jax.random.split(key)
        std = (2.0 / (in_dim + latent_dim)) ** 0.5
        params["fc_layers"].append(dict(
            W=std * jax.random.normal(kw, (in_dim, latent_dim), jnp.float32),
            b=jnp.zeros((1, latent_dim), jnp.float32)))
        params["fc_cfg"].append((bool(cfg["fc_norm"]), True))
        in_dim = latent_dim
    # Final classifier layer: no norm, no activation.
    key, kw = jax.random.split(key)
    std = (2.0 / (in_dim + cfg["classes"])) ** 0.5
    params["fc_layers"].append(dict(
        W=std * jax.random.normal(kw, (in_dim, cfg["classes"]), jnp.float32),
        b=jnp.zeros((1, cfg["classes"]), jnp.float32)))
    params["fc_cfg"].append((False, False))
    return params


# ----------------------------------------------------------------------------
# Main
# ----------------------------------------------------------------------------
if __name__ == "__main__":
    cfg = dict(
        in_dim=32,
        gnn_latent_dims=[32, 32],   # GPS layers preserve width (heads concat back)
        num_heads=[4, 4],
        latent_dims=[32, 16],       # FC stack
        classes=4,
        batch_norm=True,
        fc_norm=True,
        residual=True,
    )
    N = 32  # number of graph nodes

    key = jax.random.PRNGKey(0)
    kx, ka, kp = jax.random.split(key, 3)

    x = jax.random.normal(kx, (N, cfg["in_dim"]), jnp.float32)
    # Dense adjacency with self-loops (the `edges` input of the module).
    adj = (jax.random.uniform(ka, (N, N)) < 0.3).astype(jnp.float32)
    adj = jnp.maximum(adj, jnp.eye(N, dtype=jnp.float32))
    node_indices = jnp.arange(N, dtype=jnp.int32)

    params = init_params(kp, cfg)

    out = classifier_with_gnn_forward(x, adj, node_indices, params, clip_val=False)
    out = jax.block_until_ready(out)
    assert out.shape == (N, cfg["classes"]), out.shape
    assert bool(jnp.all(jnp.isfinite(out)))
    print("KERNEL_OK")
</pallas_src>

<mosaic_0001>
module attributes {stable_mosaic.version = 11 : i64} {
  func.func @fused_forward_kernel(%arg0: memref<32x32xi8, #tpu.memory_space<vmem>>, %arg1: memref<32x32xf32, #tpu.memory_space<vmem>>, %arg2: memref<32x36xf32, #tpu.memory_space<vmem>>, %arg3: memref<4x32xf32, #tpu.memory_space<vmem>>, %arg4: memref<32x36xf32, #tpu.memory_space<vmem>>, %arg5: memref<4x32xf32, #tpu.memory_space<vmem>>, %arg6: memref<32x32xf32, #tpu.memory_space<vmem>>, %arg7: memref<1x32xf32, #tpu.memory_space<vmem>>, %arg8: memref<32x16xf32, #tpu.memory_space<vmem>>, %arg9: memref<1x16xf32, #tpu.memory_space<vmem>>, %arg10: memref<16x4xf32, #tpu.memory_space<vmem>>, %arg11: memref<1x4xf32, #tpu.memory_space<vmem>>, %arg12: memref<32x4xf32, #tpu.memory_space<vmem>>) attributes {dimension_semantics = [], scalar_prefetch = 0 : i64, scratch_operands = 0 : i64, tpu.core_type = #tpu.core_type<tc>} {
    %c0 = arith.constant 0 : index
    %c0_0 = arith.constant 0 : index
    %0 = vector.load %arg0[%c0, %c0_0] : memref<32x32xi8, #tpu.memory_space<vmem>>, vector<32x32xi8>
    %1 = arith.sitofp %0 : vector<32x32xi8> to vector<32x32xf32>
    %cst = arith.constant 0.000000e+00 : f32
    %2 = vector.broadcast %cst : f32 to vector<32x32xf32>
    %3 = arith.cmpf ogt, %1, %2 : vector<32x32xf32>
    %cst_1 = arith.constant 0.000000e+00 : f32
    %cst_2 = arith.constant -1.000000e+30 : f32
    %4 = vector.broadcast %cst_1 : f32 to vector<32x32xf32>
    %5 = vector.broadcast %cst_2 : f32 to vector<32x32xf32>
    %6 = arith.select %3, %4, %5 : vector<32x32xi1>, vector<32x32xf32>
    %c0_3 = arith.constant 0 : index
    %c0_4 = arith.constant 0 : index
    %7 = vector.load %arg1[%c0_3, %c0_4] : memref<32x32xf32, #tpu.memory_space<vmem>>, vector<32x32xf32>
    %c0_5 = arith.constant 0 : index
    %c0_6 = arith.constant 0 : index
    %8 = vector.load %arg2[%c0_5, %c0_6] : memref<32x36xf32, #tpu.memory_space<vmem>>, vector<32x36xf32>
    %c0_7 = arith.constant 0 : index
    %c0_8 = arith.constant 0 : index
    %9 = vector.load %arg3[%c0_7, %c0_8] : memref<4x32xf32, #tpu.memory_space<vmem>>, vector<4x32xf32>
    %cst_9 = arith.constant dense<0.000000e+00> : vector<32x36xf32>
    %10 = tpu.matmul %7, %8, %cst_9 {dimension_numbers = #tpu.dot_dimension_numbers<[1], [0], [0], [1], [0, 0, 1, 1], [], []>} : vector<32x32xf32>, vector<32x36xf32>, vector<32x36xf32> -> vector<32x36xf32>
    %11 = vector.extract_strided_slice %10 {offsets = [0, 0], sizes = [32, 32], strides = [1, 1]} : vector<32x36xf32> to vector<32x32xf32>
    %12 = vector.extract_strided_slice %10 {offsets = [0, 32], sizes = [32, 4], strides = [1, 1]} : vector<32x36xf32> to vector<32x4xf32>
    %cst_10 = arith.constant dense<0.000000e+00> : vector<4x32xf32>
    %13 = tpu.matmul %9, %7, %cst_10 {dimension_numbers = #tpu.dot_dimension_numbers<[1], [1], [0], [0], [0, 0, 1, 0], [], []>} : vector<4x32xf32>, vector<32x32xf32>, vector<4x32xf32> -> vector<4x32xf32>
    %14 = vector.extract_strided_slice %12 {offsets = [0, 0], sizes = [32, 1], strides = [1, 1]} : vector<32x4xf32> to vector<32x1xf32>
    %15 = vector.extract_strided_slice %13 {offsets = [0, 0], sizes = [1, 32], strides = [1, 1]} : vector<4x32xf32> to vector<1x32xf32>
    %16 = vector.broadcast %14 : vector<32x1xf32> to vector<32x32xf32>
    %17 = vector.broadcast %15 : vector<1x32xf32> to vector<32x32xf32>
    %18 = arith.addf %16, %17 : vector<32x32xf32>
    %cst_11 = arith.constant 2.000000e-01 : f32
    %19 = vector.broadcast %cst_11 : f32 to vector<32x32xf32>
    %20 = arith.mulf %19, %18 : vector<32x32xf32>
    %21 = arith.maximumf %18, %20 : vector<32x32xf32>
    %22 = arith.addf %21, %6 : vector<32x32xf32>
    %cst_12 = arith.constant dense<0xFF800000> : vector<32xf32>
    %23 = vector.multi_reduction <maximumf>, %22, %cst_12 [1] : vector<32x32xf32> to vector<32xf32>
    %24 = vector.shape_cast %23 : vector<32xf32> to vector<32x1xf32>
    %25 = vector.broadcast %24 : vector<32x1xf32> to vector<32x32xf32>
    %26 = arith.subf %22, %25 : vector<32x32xf32>
    %27 = math.exp %26 : vector<32x32xf32>
    %cst_13 = arith.constant dense<0.000000e+00> : vector<32xf32>
    %28 = vector.multi_reduction <add>, %27, %cst_13 [1] : vector<32x32xf32> to vector<32xf32>
    %29 = vector.shape_cast %28 : vector<32xf32> to vector<32x1xf32>
    %30 = tpu.reciprocal %29 {approx = true} : vector<32x1xf32> -> vector<32x1xf32>
    %31 = vector.broadcast %30 : vector<32x1xf32> to vector<32x32xf32>
    %32 = arith.mulf %27, %31 : vector<32x32xf32>
    %33 = vector.extract_strided_slice %11 {offsets = [0, 0], sizes = [32, 8], strides = [1, 1]} : vector<32x32xf32> to vector<32x8xf32>
    %34 = arith.truncf %32 : vector<32x32xf32> to vector<32x32xbf16>
    %35 = arith.truncf %33 : vector<32x8xf32> to vector<32x8xbf16>
    %cst_14 = arith.constant dense<0.000000e+00> : vector<32x8xf32>
    %36 = tpu.matmul %34, %35, %cst_14 {dimension_numbers = #tpu.dot_dimension_numbers<[1], [0], [0], [1], [0, 0, 1, 1], [], []>} : vector<32x32xbf16>, vector<32x8xbf16>, vector<32x8xf32> -> vector<32x8xf32>
    %37 = vector.extract_strided_slice %12 {offsets = [0, 1], sizes = [32, 1], strides = [1, 1]} : vector<32x4xf32> to vector<32x1xf32>
    %38 = vector.extract_strided_slice %13 {offsets = [1, 0], sizes = [1, 32], strides = [1, 1]} : vector<4x32xf32> to vector<1x32xf32>
    %39 = vector.broadcast %37 : vector<32x1xf32> to vector<32x32xf32>
    %40 = vector.broadcast %38 : vector<1x32xf32> to vector<32x32xf32>
    %41 = arith.addf %39, %40 : vector<32x32xf32>
    %cst_15 = arith.constant 2.000000e-01 : f32
    %42 = vector.broadcast %cst_15 : f32 to vector<32x32xf32>
    %43 = arith.mulf %42, %41 : vector<32x32xf32>
    %44 = arith.maximumf %41, %43 : vector<32x32xf32>
    %45 = arith.addf %44, %6 : vector<32x32xf32>
    %cst_16 = arith.constant dense<0xFF800000> : vector<32xf32>
    %46 = vector.multi_reduction <maximumf>, %45, %cst_16 [1] : vector<32x32xf32> to vector<32xf32>
    %47 = vector.shape_cast %46 : vector<32xf32> to vector<32x1xf32>
    %48 = vector.broadcast %47 : vector<32x1xf32> to vector<32x32xf32>
    %49 = arith.subf %45, %48 : vector<32x32xf32>
    %50 = math.exp %49 : vector<32x32xf32>
    %cst_17 = arith.constant dense<0.000000e+00> : vector<32xf32>
    %51 = vector.multi_reduction <add>, %50, %cst_17 [1] : vector<32x32xf32> to vector<32xf32>
    %52 = vector.shape_cast %51 : vector<32xf32> to vector<32x1xf32>
    %53 = tpu.reciprocal %52 {approx = true} : vector<32x1xf32> -> vector<32x1xf32>
    %54 = vector.broadcast %53 : vector<32x1xf32> to vector<32x32xf32>
    %55 = arith.mulf %50, %54 : vector<32x32xf32>
    %56 = vector.extract_strided_slice %11 {offsets = [0, 8], sizes = [32, 8], strides = [1, 1]} : vector<32x32xf32> to vector<32x8xf32>
    %57 = arith.truncf %55 : vector<32x32xf32> to vector<32x32xbf16>
    %58 = arith.truncf %56 : vector<32x8xf32> to vector<32x8xbf16>
    %cst_18 = arith.constant dense<0.000000e+00> : vector<32x8xf32>
    %59 = tpu.matmul %57, %58, %cst_18 {dimension_numbers = #tpu.dot_dimension_numbers<[1], [0], [0], [1], [0, 0, 1, 1], [], []>} : vector<32x32xbf16>, vector<32x8xbf16>, vector<32x8xf32> -> vector<32x8xf32>
    %60 = vector.extract_strided_slice %12 {offsets = [0, 2], sizes = [32, 1], strides = [1, 1]} : vector<32x4xf32> to vector<32x1xf32>
    %61 = vector.extract_strided_slice %13 {offsets = [2, 0], sizes = [1, 32], strides = [1, 1]} : vector<4x32xf32> to vector<1x32xf32>
    %62 = vector.broadcast %60 : vector<32x1xf32> to vector<32x32xf32>
    %63 = vector.broadcast %61 : vector<1x32xf32> to vector<32x32xf32>
    %64 = arith.addf %62, %63 : vector<32x32xf32>
    %cst_19 = arith.constant 2.000000e-01 : f32
    %65 = vector.broadcast %cst_19 : f32 to vector<32x32xf32>
    %66 = arith.mulf %65, %64 : vector<32x32xf32>
    %67 = arith.maximumf %64, %66 : vector<32x32xf32>
    %68 = arith.addf %67, %6 : vector<32x32xf32>
    %cst_20 = arith.constant dense<0xFF800000> : vector<32xf32>
    %69 = vector.multi_reduction <maximumf>, %68, %cst_20 [1] : vector<32x32xf32> to vector<32xf32>
    %70 = vector.shape_cast %69 : vector<32xf32> to vector<32x1xf32>
    %71 = vector.broadcast %70 : vector<32x1xf32> to vector<32x32xf32>
    %72 = arith.subf %68, %71 : vector<32x32xf32>
    %73 = math.exp %72 : vector<32x32xf32>
    %cst_21 = arith.constant dense<0.000000e+00> : vector<32xf32>
    %74 = vector.multi_reduction <add>, %73, %cst_21 [1] : vector<32x32xf32> to vector<32xf32>
    %75 = vector.shape_cast %74 : vector<32xf32> to vector<32x1xf32>
    %76 = tpu.reciprocal %75 {approx = true} : vector<32x1xf32> -> vector<32x1xf32>
    %77 = vector.broadcast %76 : vector<32x1xf32> to vector<32x32xf32>
    %78 = arith.mulf %73, %77 : vector<32x32xf32>
    %79 = vector.extract_strided_slice %11 {offsets = [0, 16], sizes = [32, 8], strides = [1, 1]} : vector<32x32xf32> to vector<32x8xf32>
    %80 = arith.truncf %78 : vector<32x32xf32> to vector<32x32xbf16>
    %81 = arith.truncf %79 : vector<32x8xf32> to vector<32x8xbf16>
    %cst_22 = arith.constant dense<0.000000e+00> : vector<32x8xf32>
    %82 = tpu.matmul %80, %81, %cst_22 {dimension_numbers = #tpu.dot_dimension_numbers<[1], [0], [0], [1], [0, 0, 1, 1], [], []>} : vector<32x32xbf16>, vector<32x8xbf16>, vector<32x8xf32> -> vector<32x8xf32>
    %83 = vector.extract_strided_slice %12 {offsets = [0, 3], sizes = [32, 1], strides = [1, 1]} : vector<32x4xf32> to vector<32x1xf32>
    %84 = vector.extract_strided_slice %13 {offsets = [3, 0], sizes = [1, 32], strides = [1, 1]} : vector<4x32xf32> to vector<1x32xf32>
    %85 = vector.broadcast %83 : vector<32x1xf32> to vector<32x32xf32>
    %86 = vector.broadcast %84 : vector<1x32xf32> to vector<32x32xf32>
    %87 = arith.addf %85, %86 : vector<32x32xf32>
    %cst_23 = arith.constant 2.000000e-01 : f32
    %88 = vector.broadcast %cst_23 : f32 to vector<32x32xf32>
    %89 = arith.mulf %88, %87 : vector<32x32xf32>
    %90 = arith.maximumf %87, %89 : vector<32x32xf32>
    %91 = arith.addf %90, %6 : vector<32x32xf32>
    %cst_24 = arith.constant dense<0xFF800000> : vector<32xf32>
    %92 = vector.multi_reduction <maximumf>, %91, %cst_24 [1] : vector<32x32xf32> to vector<32xf32>
    %93 = vector.shape_cast %92 : vector<32xf32> to vector<32x1xf32>
    %94 = vector.broadcast %93 : vector<32x1xf32> to vector<32x32xf32>
    %95 = arith.subf %91, %94 : vector<32x32xf32>
    %96 = math.exp %95 : vector<32x32xf32>
    %cst_25 = arith.constant dense<0.000000e+00> : vector<32xf32>
    %97 = vector.multi_reduction <add>, %96, %cst_25 [1] : vector<32x32xf32> to vector<32xf32>
    %98 = vector.shape_cast %97 : vector<32xf32> to vector<32x1xf32>
    %99 = tpu.reciprocal %98 {approx = true} : vector<32x1xf32> -> vector<32x1xf32>
    %100 = vector.broadcast %99 : vector<32x1xf32> to vector<32x32xf32>
    %101 = arith.mulf %96, %100 : vector<32x32xf32>
    %102 = vector.extract_strided_slice %11 {offsets = [0, 24], sizes = [32, 8], strides = [1, 1]} : vector<32x32xf32> to vector<32x8xf32>
    %103 = arith.truncf %101 : vector<32x32xf32> to vector<32x32xbf16>
    %104 = arith.truncf %102 : vector<32x8xf32> to vector<32x8xbf16>
    %cst_26 = arith.constant dense<0.000000e+00> : vector<32x8xf32>
    %105 = tpu.matmul %103, %104, %cst_26 {dimension_numbers = #tpu.dot_dimension_numbers<[1], [0], [0], [1], [0, 0, 1, 1], [], []>} : vector<32x32xbf16>, vector<32x8xbf16>, vector<32x8xf32> -> vector<32x8xf32>
    %106 = tpu.concatenate %36, %59, %82, %105 in 1 : vector<32x8xf32>, vector<32x8xf32>, vector<32x8xf32>, vector<32x8xf32> -> vector<32x32xf32>
    %cst_27 = arith.constant dense<0.000000e+00> : vector<32xf32>
    %107 = vector.multi_reduction <add>, %106, %cst_27 [0] : vector<32x32xf32> to vector<32xf32>
    %108 = vector.shape_cast %107 : vector<32xf32> to vector<1x32xf32>
    %cst_28 = arith.constant 3.200000e+01 : f32
    %109 = vector.broadcast %cst_28 : f32 to vector<1x32xf32>
    %110 = arith.divf %108, %109 : vector<1x32xf32>
    %111 = vector.broadcast %110 : vector<1x32xf32> to vector<32x32xf32>
    %112 = arith.subf %106, %111 : vector<32x32xf32>
    %113 = arith.mulf %112, %112 : vector<32x32xf32>
    %cst_29 = arith.constant dense<0.000000e+00> : vector<32xf32>
    %114 = vector.multi_reduction <add>, %113, %cst_29 [0] : vector<32x32xf32> to vector<32xf32>
    %115 = vector.shape_cast %114 : vector<32xf32> to vector<1x32xf32>
    %cst_30 = arith.constant 3.200000e+01 : f32
    %116 = vector.broadcast %cst_30 : f32 to vector<1x32xf32>
    %117 = arith.divf %115, %116 : vector<1x32xf32>
    %118 = vector.broadcast %110 : vector<1x32xf32> to vector<32x32xf32>
    %119 = arith.subf %106, %118 : vector<32x32xf32>
    %cst_31 = arith.constant 9.99999974E-6 : f32
    %120 = vector.broadcast %cst_31 : f32 to vector<1x32xf32>
    %121 = arith.addf %117, %120 : vector<1x32xf32>
    %122 = math.rsqrt %121 : vector<1x32xf32>
    %123 = vector.broadcast %122 : vector<1x32xf32> to vector<32x32xf32>
    %124 = arith.mulf %119, %123 : vector<32x32xf32>
    %cst_32 = arith.constant 0.000000e+00 : f32
    %125 = vector.broadcast %cst_32 : f32 to vector<32x32xf32>
    %126 = arith.cmpf ogt, %124, %125 : vector<32x32xf32>
    %127 = math.exp %124 : vector<32x32xf32>
    %cst_33 = arith.constant 1.000000e+00 : f32
    %128 = vector.broadcast %cst_33 : f32 to vector<32x32xf32>
    %129 = arith.subf %127, %128 : vector<32x32xf32>
    %130 = arith.select %126, %124, %129 : vector<32x32xi1>, vector<32x32xf32>
    %131 = arith.addf %130, %7 : vector<32x32xf32>
    %c0_34 = arith.constant 0 : index
    %c0_35 = arith.constant 0 : index
    %132 = vector.load %arg4[%c0_34, %c0_35] : memref<32x36xf32, #tpu.memory_space<vmem>>, vector<32x36xf32>
    %c0_36 = arith.constant 0 : index
    %c0_37 = arith.constant 0 : index
    %133 = vector.load %arg5[%c0_36, %c0_37] : memref<4x32xf32, #tpu.memory_space<vmem>>, vector<4x32xf32>
    %cst_38 = arith.constant dense<0.000000e+00> : vector<32x36xf32>
    %134 = tpu.matmul %131, %132, %cst_38 {dimension_numbers = #tpu.dot_dimension_numbers<[1], [0], [0], [1], [0, 0, 1, 1], [], []>} : vector<32x32xf32>, vector<32x36xf32>, vector<32x36xf32> -> vector<32x36xf32>
    %135 = vector.extract_strided_slice %134 {offsets = [0, 0], sizes = [32, 32], strides = [1, 1]} : vector<32x36xf32> to vector<32x32xf32>
    %136 = vector.extract_strided_slice %134 {offsets = [0, 32], sizes = [32, 4], strides = [1, 1]} : vector<32x36xf32> to vector<32x4xf32>
    %cst_39 = arith.constant dense<0.000000e+00> : vector<4x32xf32>
    %137 = tpu.matmul %133, %131, %cst_39 {dimension_numbers = #tpu.dot_dimension_numbers<[1], [1], [0], [0], [0, 0, 1, 0], [], []>} : vector<4x32xf32>, vector<32x32xf32>, vector<4x32xf32> -> vector<4x32xf32>
    %138 = vector.extract_strided_slice %136 {offsets = [0, 0], sizes = [32, 1], strides = [1, 1]} : vector<32x4xf32> to vector<32x1xf32>
    %139 = vector.extract_strided_slice %137 {offsets = [0, 0], sizes = [1, 32], strides = [1, 1]} : vector<4x32xf32> to vector<1x32xf32>
    %140 = vector.broadcast %138 : vector<32x1xf32> to vector<32x32xf32>
    %141 = vector.broadcast %139 : vector<1x32xf32> to vector<32x32xf32>
    %142 = arith.addf %140, %141 : vector<32x32xf32>
    %cst_40 = arith.constant 2.000000e-01 : f32
    %143 = vector.broadcast %cst_40 : f32 to vector<32x32xf32>
    %144 = arith.mulf %143, %142 : vector<32x32xf32>
    %145 = arith.maximumf %142, %144 : vector<32x32xf32>
    %146 = arith.addf %145, %6 : vector<32x32xf32>
    %cst_41 = arith.constant dense<0xFF800000> : vector<32xf32>
    %147 = vector.multi_reduction <maximumf>, %146, %cst_41 [1] : vector<32x32xf32> to vector<32xf32>
    %148 = vector.shape_cast %147 : vector<32xf32> to vector<32x1xf32>
    %149 = vector.broadcast %148 : vector<32x1xf32> to vector<32x32xf32>
    %150 = arith.subf %146, %149 : vector<32x32xf32>
    %151 = math.exp %150 : vector<32x32xf32>
    %cst_42 = arith.constant dense<0.000000e+00> : vector<32xf32>
    %152 = vector.multi_reduction <add>, %151, %cst_42 [1] : vector<32x32xf32> to vector<32xf32>
    %153 = vector.shape_cast %152 : vector<32xf32> to vector<32x1xf32>
    %154 = tpu.reciprocal %153 {approx = true} : vector<32x1xf32> -> vector<32x1xf32>
    %155 = vector.broadcast %154 : vector<32x1xf32> to vector<32x32xf32>
    %156 = arith.mulf %151, %155 : vector<32x32xf32>
    %157 = vector.extract_strided_slice %135 {offsets = [0, 0], sizes = [32, 8], strides = [1, 1]} : vector<32x32xf32> to vector<32x8xf32>
    %158 = arith.truncf %156 : vector<32x32xf32> to vector<32x32xbf16>
    %159 = arith.truncf %157 : vector<32x8xf32> to vector<32x8xbf16>
    %cst_43 = arith.constant dense<0.000000e+00> : vector<32x8xf32>
    %160 = tpu.matmul %158, %159, %cst_43 {dimension_numbers = #tpu.dot_dimension_numbers<[1], [0], [0], [1], [0, 0, 1, 1], [], []>} : vector<32x32xbf16>, vector<32x8xbf16>, vector<32x8xf32> -> vector<32x8xf32>
    %161 = vector.extract_strided_slice %136 {offsets = [0, 1], sizes = [32, 1], strides = [1, 1]} : vector<32x4xf32> to vector<32x1xf32>
    %162 = vector.extract_strided_slice %137 {offsets = [1, 0], sizes = [1, 32], strides = [1, 1]} : vector<4x32xf32> to vector<1x32xf32>
    %163 = vector.broadcast %161 : vector<32x1xf32> to vector<32x32xf32>
    %164 = vector.broadcast %162 : vector<1x32xf32> to vector<32x32xf32>
    %165 = arith.addf %163, %164 : vector<32x32xf32>
    %cst_44 = arith.constant 2.000000e-01 : f32
    %166 = vector.broadcast %cst_44 : f32 to vector<32x32xf32>
    %167 = arith.mulf %166, %165 : vector<32x32xf32>
    %168 = arith.maximumf %165, %167 : vector<32x32xf32>
    %169 = arith.addf %168, %6 : vector<32x32xf32>
    %cst_45 = arith.constant dense<0xFF800000> : vector<32xf32>
    %170 = vector.multi_reduction <maximumf>, %169, %cst_45 [1] : vector<32x32xf32> to vector<32xf32>
    %171 = vector.shape_cast %170 : vector<32xf32> to vector<32x1xf32>
    %172 = vector.broadcast %171 : vector<32x1xf32> to vector<32x32xf32>
    %173 = arith.subf %169, %172 : vector<32x32xf32>
    %174 = math.exp %173 : vector<32x32xf32>
    %cst_46 = arith.constant dense<0.000000e+00> : vector<32xf32>
    %175 = vector.multi_reduction <add>, %174, %cst_46 [1] : vector<32x32xf32> to vector<32xf32>
    %176 = vector.shape_cast %175 : vector<32xf32> to vector<32x1xf32>
    %177 = tpu.reciprocal %176 {approx = true} : vector<32x1xf32> -> vector<32x1xf32>
    %178 = vector.broadcast %177 : vector<32x1xf32> to vector<32x32xf32>
    %179 = arith.mulf %174, %178 : vector<32x32xf32>
    %180 = vector.extract_strided_slice %135 {offsets = [0, 8], sizes = [32, 8], strides = [1, 1]} : vector<32x32xf32> to vector<32x8xf32>
    %181 = arith.truncf %179 : vector<32x32xf32> to vector<32x32xbf16>
    %182 = arith.truncf %180 : vector<32x8xf32> to vector<32x8xbf16>
    %cst_47 = arith.constant dense<0.000000e+00> : vector<32x8xf32>
    %183 = tpu.matmul %181, %182, %cst_47 {dimension_numbers = #tpu.dot_dimension_numbers<[1], [0], [0], [1], [0, 0, 1, 1], [], []>} : vector<32x32xbf16>, vector<32x8xbf16>, vector<32x8xf32> -> vector<32x8xf32>
    %184 = vector.extract_strided_slice %136 {offsets = [0, 2], sizes = [32, 1], strides = [1, 1]} : vector<32x4xf32> to vector<32x1xf32>
    %185 = vector.extract_strided_slice %137 {offsets = [2, 0], sizes = [1, 32], strides = [1, 1]} : vector<4x32xf32> to vector<1x32xf32>
    %186 = vector.broadcast %184 : vector<32x1xf32> to vector<32x32xf32>
    %187 = vector.broadcast %185 : vector<1x32xf32> to vector<32x32xf32>
    %188 = arith.addf %186, %187 : vector<32x32xf32>
    %cst_48 = arith.constant 2.000000e-01 : f32
    %189 = vector.broadcast %cst_48 : f32 to vector<32x32xf32>
    %190 = arith.mulf %189, %188 : vector<32x32xf32>
    %191 = arith.maximumf %188, %190 : vector<32x32xf32>
    %192 = arith.addf %191, %6 : vector<32x32xf32>
    %cst_49 = arith.constant dense<0xFF800000> : vector<32xf32>
    %193 = vector.multi_reduction <maximumf>, %192, %cst_49 [1] : vector<32x32xf32> to vector<32xf32>
    %194 = vector.shape_cast %193 : vector<32xf32> to vector<32x1xf32>
    %195 = vector.broadcast %194 : vector<32x1xf32> to vector<32x32xf32>
    %196 = arith.subf %192, %195 : vector<32x32xf32>
    %197 = math.exp %196 : vector<32x32xf32>
    %cst_50 = arith.constant dense<0.000000e+00> : vector<32xf32>
    %198 = vector.multi_reduction <add>, %197, %cst_50 [1] : vector<32x32xf32> to vector<32xf32>
    %199 = vector.shape_cast %198 : vector<32xf32> to vector<32x1xf32>
    %200 = tpu.reciprocal %199 {approx = true} : vector<32x1xf32> -> vector<32x1xf32>
    %201 = vector.broadcast %200 : vector<32x1xf32> to vector<32x32xf32>
    %202 = arith.mulf %197, %201 : vector<32x32xf32>
    %203 = vector.extract_strided_slice %135 {offsets = [0, 16], sizes = [32, 8], strides = [1, 1]} : vector<32x32xf32> to vector<32x8xf32>
    %204 = arith.truncf %202 : vector<32x32xf32> to vector<32x32xbf16>
    %205 = arith.truncf %203 : vector<32x8xf32> to vector<32x8xbf16>
    %cst_51 = arith.constant dense<0.000000e+00> : vector<32x8xf32>
    %206 = tpu.matmul %204, %205, %cst_51 {dimension_numbers = #tpu.dot_dimension_numbers<[1], [0], [0], [1], [0, 0, 1, 1], [], []>} : vector<32x32xbf16>, vector<32x8xbf16>, vector<32x8xf32> -> vector<32x8xf32>
    %207 = vector.extract_strided_slice %136 {offsets = [0, 3], sizes = [32, 1], strides = [1, 1]} : vector<32x4xf32> to vector<32x1xf32>
    %208 = vector.extract_strided_slice %137 {offsets = [3, 0], sizes = [1, 32], strides = [1, 1]} : vector<4x32xf32> to vector<1x32xf32>
    %209 = vector.broadcast %207 : vector<32x1xf32> to vector<32x32xf32>
    %210 = vector.broadcast %208 : vector<1x32xf32> to vector<32x32xf32>
    %211 = arith.addf %209, %210 : vector<32x32xf32>
    %cst_52 = arith.constant 2.000000e-01 : f32
    %212 = vector.broadcast %cst_52 : f32 to vector<32x32xf32>
    %213 = arith.mulf %212, %211 : vector<32x32xf32>
    %214 = arith.maximumf %211, %213 : vector<32x32xf32>
    %215 = arith.addf %214, %6 : vector<32x32xf32>
    %cst_53 = arith.constant dense<0xFF800000> : vector<32xf32>
    %216 = vector.multi_reduction <maximumf>, %215, %cst_53 [1] : vector<32x32xf32> to vector<32xf32>
    %217 = vector.shape_cast %216 : vector<32xf32> to vector<32x1xf32>
    %218 = vector.broadcast %217 : vector<32x1xf32> to vector<32x32xf32>
    %219 = arith.subf %215, %218 : vector<32x32xf32>
    %220 = math.exp %219 : vector<32x32xf32>
    %cst_54 = arith.constant dense<0.000000e+00> : vector<32xf32>
    %221 = vector.multi_reduction <add>, %220, %cst_54 [1] : vector<32x32xf32> to vector<32xf32>
    %222 = vector.shape_cast %221 : vector<32xf32> to vector<32x1xf32>
    %223 = tpu.reciprocal %222 {approx = true} : vector<32x1xf32> -> vector<32x1xf32>
    %224 = vector.broadcast %223 : vector<32x1xf32> to vector<32x32xf32>
    %225 = arith.mulf %220, %224 : vector<32x32xf32>
    %226 = vector.extract_strided_slice %135 {offsets = [0, 24], sizes = [32, 8], strides = [1, 1]} : vector<32x32xf32> to vector<32x8xf32>
    %227 = arith.truncf %225 : vector<32x32xf32> to vector<32x32xbf16>
    %228 = arith.truncf %226 : vector<32x8xf32> to vector<32x8xbf16>
    %cst_55 = arith.constant dense<0.000000e+00> : vector<32x8xf32>
    %229 = tpu.matmul %227, %228, %cst_55 {dimension_numbers = #tpu.dot_dimension_numbers<[1], [0], [0], [1], [0, 0, 1, 1], [], []>} : vector<32x32xbf16>, vector<32x8xbf16>, vector<32x8xf32> -> vector<32x8xf32>
    %230 = tpu.concatenate %160, %183, %206, %229 in 1 : vector<32x8xf32>, vector<32x8xf32>, vector<32x8xf32>, vector<32x8xf32> -> vector<32x32xf32>
    %cst_56 = arith.constant dense<0.000000e+00> : vector<32xf32>
    %231 = vector.multi_reduction <add>, %230, %cst_56 [0] : vector<32x32xf32> to vector<32xf32>
    %232 = vector.shape_cast %231 : vector<32xf32> to vector<1x32xf32>
    %cst_57 = arith.constant 3.200000e+01 : f32
    %233 = vector.broadcast %cst_57 : f32 to vector<1x32xf32>
    %234 = arith.divf %232, %233 : vector<1x32xf32>
    %235 = vector.broadcast %234 : vector<1x32xf32> to vector<32x32xf32>
    %236 = arith.subf %230, %235 : vector<32x32xf32>
    %237 = arith.mulf %236, %236 : vector<32x32xf32>
    %cst_58 = arith.constant dense<0.000000e+00> : vector<32xf32>
    %238 = vector.multi_reduction <add>, %237, %cst_58 [0] : vector<32x32xf32> to vector<32xf32>
    %239 = vector.shape_cast %238 : vector<32xf32> to vector<1x32xf32>
    %cst_59 = arith.constant 3.200000e+01 : f32
    %240 = vector.broadcast %cst_59 : f32 to vector<1x32xf32>
    %241 = arith.divf %239, %240 : vector<1x32xf32>
    %242 = vector.broadcast %234 : vector<1x32xf32> to vector<32x32xf32>
    %243 = arith.subf %230, %242 : vector<32x32xf32>
    %cst_60 = arith.constant 9.99999974E-6 : f32
    %244 = vector.broadcast %cst_60 : f32 to vector<1x32xf32>
    %245 = arith.addf %241, %244 : vector<1x32xf32>
    %246 = math.rsqrt %245 : vector<1x32xf32>
    %247 = vector.broadcast %246 : vector<1x32xf32> to vector<32x32xf32>
    %248 = arith.mulf %243, %247 : vector<32x32xf32>
    %cst_61 = arith.constant 0.000000e+00 : f32
    %249 = vector.broadcast %cst_61 : f32 to vector<32x32xf32>
    %250 = arith.cmpf ogt, %248, %249 : vector<32x32xf32>
    %251 = math.exp %248 : vector<32x32xf32>
    %cst_62 = arith.constant 1.000000e+00 : f32
    %252 = vector.broadcast %cst_62 : f32 to vector<32x32xf32>
    %253 = arith.subf %251, %252 : vector<32x32xf32>
    %254 = arith.select %250, %248, %253 : vector<32x32xi1>, vector<32x32xf32>
    %255 = arith.addf %254, %131 : vector<32x32xf32>
    %c0_63 = arith.constant 0 : index
    %c0_64 = arith.constant 0 : index
    %256 = vector.load %arg6[%c0_63, %c0_64] : memref<32x32xf32, #tpu.memory_space<vmem>>, vector<32x32xf32>
    %c0_65 = arith.constant 0 : index
    %c0_66 = arith.constant 0 : index
    %257 = vector.load %arg7[%c0_65, %c0_66] : memref<1x32xf32, #tpu.memory_space<vmem>>, vector<1x32xf32>
    %cst_67 = arith.constant dense<0.000000e+00> : vector<32x32xf32>
    %258 = tpu.matmul %255, %256, %cst_67 {dimension_numbers = #tpu.dot_dimension_numbers<[1], [0], [0], [1], [0, 0, 1, 1], [], []>} : vector<32x32xf32>, vector<32x32xf32>, vector<32x32xf32> -> vector<32x32xf32>
    %259 = vector.broadcast %257 : vector<1x32xf32> to vector<32x32xf32>
    %260 = arith.addf %258, %259 : vector<32x32xf32>
    %cst_68 = arith.constant dense<0.000000e+00> : vector<32xf32>
    %261 = vector.multi_reduction <add>, %260, %cst_68 [0] : vector<32x32xf32> to vector<32xf32>
    %262 = vector.shape_cast %261 : vector<32xf32> to vector<1x32xf32>
    %cst_69 = arith.constant 3.200000e+01 : f32
    %263 = vector.broadcast %cst_69 : f32 to vector<1x32xf32>
    %264 = arith.divf %262, %263 : vector<1x32xf32>
    %265 = vector.broadcast %264 : vector<1x32xf32> to vector<32x32xf32>
    %266 = arith.subf %260, %265 : vector<32x32xf32>
    %267 = arith.mulf %266, %266 : vector<32x32xf32>
    %cst_70 = arith.constant dense<0.000000e+00> : vector<32xf32>
    %268 = vector.multi_reduction <add>, %267, %cst_70 [0] : vector<32x32xf32> to vector<32xf32>
    %269 = vector.shape_cast %268 : vector<32xf32> to vector<1x32xf32>
    %cst_71 = arith.constant 3.200000e+01 : f32
    %270 = vector.broadcast %cst_71 : f32 to vector<1x32xf32>
    %271 = arith.divf %269, %270 : vector<1x32xf32>
    %272 = vector.broadcast %264 : vector<1x32xf32> to vector<32x32xf32>
    %273 = arith.subf %260, %272 : vector<32x32xf32>
    %cst_72 = arith.constant 9.99999974E-6 : f32
    %274 = vector.broadcast %cst_72 : f32 to vector<1x32xf32>
    %275 = arith.addf %271, %274 : vector<1x32xf32>
    %276 = math.rsqrt %275 : vector<1x32xf32>
    %277 = vector.broadcast %276 : vector<1x32xf32> to vector<32x32xf32>
    %278 = arith.mulf %273, %277 : vector<32x32xf32>
    %cst_73 = arith.constant 0.000000e+00 : f32
    %279 = vector.broadcast %cst_73 : f32 to vector<32x32xf32>
    %280 = arith.cmpf ogt, %278, %279 : vector<32x32xf32>
    %281 = math.exp %278 : vector<32x32xf32>
    %cst_74 = arith.constant 1.000000e+00 : f32
    %282 = vector.broadcast %cst_74 : f32 to vector<32x32xf32>
    %283 = arith.subf %281, %282 : vector<32x32xf32>
    %284 = arith.select %280, %278, %283 : vector<32x32xi1>, vector<32x32xf32>
    %c0_75 = arith.constant 0 : index
    %c0_76 = arith.constant 0 : index
    %285 = vector.load %arg8[%c0_75, %c0_76] : memref<32x16xf32, #tpu.memory_space<vmem>>, vector<32x16xf32>
    %c0_77 = arith.constant 0 : index
    %c0_78 = arith.constant 0 : index
    %286 = vector.load %arg9[%c0_77, %c0_78] : memref<1x16xf32, #tpu.memory_space<vmem>>, vector<1x16xf32>
    %cst_79 = arith.constant dense<0.000000e+00> : vector<32x16xf32>
    %287 = tpu.matmul %284, %285, %cst_79 {dimension_numbers = #tpu.dot_dimension_numbers<[1], [0], [0], [1], [0, 0, 1, 1], [], []>} : vector<32x32xf32>, vector<32x16xf32>, vector<32x16xf32> -> vector<32x16xf32>
    %288 = vector.broadcast %286 : vector<1x16xf32> to vector<32x16xf32>
    %289 = arith.addf %287, %288 : vector<32x16xf32>
    %cst_80 = arith.constant dense<0.000000e+00> : vector<16xf32>
    %290 = vector.multi_reduction <add>, %289, %cst_80 [0] : vector<32x16xf32> to vector<16xf32>
    %291 = vector.shape_cast %290 : vector<16xf32> to vector<1x16xf32>
    %cst_81 = arith.constant 3.200000e+01 : f32
    %292 = vector.broadcast %cst_81 : f32 to vector<1x16xf32>
    %293 = arith.divf %291, %292 : vector<1x16xf32>
    %294 = vector.broadcast %293 : vector<1x16xf32> to vector<32x16xf32>
    %295 = arith.subf %289, %294 : vector<32x16xf32>
    %296 = arith.mulf %295, %295 : vector<32x16xf32>
    %cst_82 = arith.constant dense<0.000000e+00> : vector<16xf32>
    %297 = vector.multi_reduction <add>, %296, %cst_82 [0] : vector<32x16xf32> to vector<16xf32>
    %298 = vector.shape_cast %297 : vector<16xf32> to vector<1x16xf32>
    %cst_83 = arith.constant 3.200000e+01 : f32
    %299 = vector.broadcast %cst_83 : f32 to vector<1x16xf32>
    %300 = arith.divf %298, %299 : vector<1x16xf32>
    %301 = vector.broadcast %293 : vector<1x16xf32> to vector<32x16xf32>
    %302 = arith.subf %289, %301 : vector<32x16xf32>
    %cst_84 = arith.constant 9.99999974E-6 : f32
    %303 = vector.broadcast %cst_84 : f32 to vector<1x16xf32>
    %304 = arith.addf %300, %303 : vector<1x16xf32>
    %305 = math.rsqrt %304 : vector<1x16xf32>
    %306 = vector.broadcast %305 : vector<1x16xf32> to vector<32x16xf32>
    %307 = arith.mulf %302, %306 : vector<32x16xf32>
    %cst_85 = arith.constant 0.000000e+00 : f32
    %308 = vector.broadcast %cst_85 : f32 to vector<32x16xf32>
    %309 = arith.cmpf ogt, %307, %308 : vector<32x16xf32>
    %310 = math.exp %307 : vector<32x16xf32>
    %cst_86 = arith.constant 1.000000e+00 : f32
    %311 = vector.broadcast %cst_86 : f32 to vector<32x16xf32>
    %312 = arith.subf %310, %311 : vector<32x16xf32>
    %313 = arith.select %309, %307, %312 : vector<32x16xi1>, vector<32x16xf32>
    %c0_87 = arith.constant 0 : index
    %c0_88 = arith.constant 0 : index
    %314 = vector.load %arg10[%c0_87, %c0_88] : memref<16x4xf32, #tpu.memory_space<vmem>>, vector<16x4xf32>
    %c0_89 = arith.constant 0 : index
    %c0_90 = arith.constant 0 : index
    %315 = vector.load %arg11[%c0_89, %c0_90] : memref<1x4xf32, #tpu.memory_space<vmem>>, vector<1x4xf32>
    %cst_91 = arith.constant dense<0.000000e+00> : vector<32x4xf32>
    %316 = tpu.matmul %313, %314, %cst_91 {dimension_numbers = #tpu.dot_dimension_numbers<[1], [0], [0], [1], [0, 0, 1, 1], [], []>} : vector<32x16xf32>, vector<16x4xf32>, vector<32x4xf32> -> vector<32x4xf32>
    %317 = vector.broadcast %315 : vector<1x4xf32> to vector<32x4xf32>
    %318 = arith.addf %316, %317 : vector<32x4xf32>
    %c0_92 = arith.constant 0 : index
    %c0_93 = arith.constant 0 : index
    %319 = vector.load %arg12[%c0_92, %c0_93] : memref<32x4xf32, #tpu.memory_space<vmem>>, vector<32x4xf32>
    tpu.vector_store %arg12[%c0_92, %c0_93], %318 {strides = array<i32>} : memref<32x4xf32, #tpu.memory_space<vmem>>, vector<32x4xf32>,
    return
  }
}

</mosaic_0001>

<llo_original>
// kernel: tpu_custom_call.1
$region0: #{tpu_custom_call.1}
  #allocation0 [shape = 'u32[]', space=smem, size = 0x4, offset = 0x4, fixed_abs, tag = 'smem constant byte address 0x4 - core index']
  #allocation1 [shape = 'u32[144,128]{1,0:T(1,128)}', space=vmem, size = 0x12000, scoped, tag = 'internal scratch']
  %s0 = inlined_call_operand.hbm [shape: s8[32,32], index: 0, kind: input, shape index: {}]
  %s1 = inlined_call_operand.vmem [shape: f32[32,32], index: 1, kind: input, shape index: {}]
  %s2 = inlined_call_operand.vmem [shape: f32[32,36], index: 2, kind: input, shape index: {}]
  %s3 = inlined_call_operand.hbm [shape: f32[4,32], index: 3, kind: input, shape index: {}]
  %s4 = inlined_call_operand.hbm [shape: f32[32,36], index: 4, kind: input, shape index: {}]
  %s5 = inlined_call_operand.vmem [shape: f32[4,32], index: 5, kind: input, shape index: {}]
  %s6 = inlined_call_operand.hbm [shape: f32[32,32], index: 6, kind: input, shape index: {}]
  %s7 = inlined_call_operand.vmem [shape: f32[1,32], index: 7, kind: input, shape index: {}]
  %s8 = inlined_call_operand.vmem [shape: f32[32,16], index: 8, kind: input, shape index: {}]
  %s9 = inlined_call_operand.vmem [shape: f32[1,16], index: 9, kind: input, shape index: {}]
  %s10 = inlined_call_operand.vmem [shape: f32[16,4], index: 10, kind: input, shape index: {}]
  %s11 = inlined_call_operand.vmem [shape: f32[1,4], index: 11, kind: input, shape index: {}]
  %s12 = inlined_call_operand.vmem [shape: f32[32,4], index: 12, kind: output, shape index: {}]
  %s13 = sld [smem:[#allocation0]]
  $region74: #{tpu_custom_call.1} parent=0
    _
  %s15 = ssub.s32 1, %s13
  %s16 = scalar_select 0, %s15, %s13
  $region1: #{tpu_custom_call.1} parent=0
    #allocation2 [shape = 'u8[4096]{0}', space=vmem, size = 0x1000, scoped, tag = 'input window, operand 0, single buffered']
    #allocation3 [shape = 's32[1]{0}', space=sflag, size = 0x4, scoped, tag = 'scoped memory for tpu_custom_call.1']
    #allocation4 [shape = 'u8[2048]{0}', space=vmem, size = 0x800, scoped, tag = 'input window, operand 3, single buffered']
    #allocation5 [shape = 's32[1]{0}', space=sflag, size = 0x4, scoped, tag = 'scoped memory for tpu_custom_call.1']
    #allocation6 [shape = 'u8[16384]{0}', space=vmem, size = 0x4000, scoped, tag = 'input window, operand 4, single buffered']
    #allocation7 [shape = 'u8[16384]{0}', space=vmem, size = 0x4000, scoped, tag = 'input window, operand 6, single buffered']
    #allocation8 [shape = 's32[1]{0}', space=sflag, size = 0x4, scoped, tag = 'scoped memory for tpu_custom_call.1']
    %17 = vsyncpa [#allocation3], 0
    %18 = vsyncpa [#allocation5], 0
    %19 = vsyncpa [#allocation8], 0
    // Predicated region
    $region2: #{tpu_custom_call.1} parent=1 // pred_check
      _
    $region3: #{tpu_custom_call.1} parent=1 // pred_check_branch
      %21 = sbr.rel (0) target = $region5
    $region4: #{tpu_custom_call.1} parent=1 // pred_region
      %s23 = ssub.s32 128, 128
      %24 = vsyncadd [#allocation3], %s23
      %s26 = sshll.u32 [#allocation2], 4
      %s27 = int_to_ptr.vmem [resolvable:$true] %s26
      %29 = dma.hbm_to_vmem [thread:$0]  %s0, 128, %s27, [#allocation3]
    $region5: #{tpu_custom_call.1} parent=1 // pred_fallthru
      _
    // Predicated region
    $region6: #{tpu_custom_call.1} parent=1 // pred_check
      _
    $region7: #{tpu_custom_call.1} parent=1 // pred_check_branch
      %31 = sbr.rel (0) target = $region9
    $region8: #{tpu_custom_call.1} parent=1 // pred_region
      _
    $region9: #{tpu_custom_call.1} parent=1 // pred_fallthru
      _
    // Predicated region
    $region10: #{tpu_custom_call.1} parent=1 // pred_check
      _
    $region11: #{tpu_custom_call.1} parent=1 // pred_check_branch
      %33 = sbr.rel (0) target = $region13
    $region12: #{tpu_custom_call.1} parent=1 // pred_region
      _
    $region13: #{tpu_custom_call.1} parent=1 // pred_fallthru
      _
    // Predicated region
    $region14: #{tpu_custom_call.1} parent=1 // pred_check
      _
    $region15: #{tpu_custom_call.1} parent=1 // pred_check_branch
      %35 = sbr.rel (0) target = $region17
    $region16: #{tpu_custom_call.1} parent=1 // pred_region
      %s37 = ssub.s32 64, 64
      %38 = vsyncadd [#allocation5], %s37
      %s40 = sshll.u32 [#allocation4], 4
      %s41 = int_to_ptr.vmem [resolvable:$true] %s40
      %43 = dma.hbm_to_vmem [thread:$0]  %s3, 64, %s41, [#allocation5]
    $region17: #{tpu_custom_call.1} parent=1 // pred_fallthru
      _
    // Predicated region
    $region18: #{tpu_custom_call.1} parent=1 // pred_check
      _
    $region19: #{tpu_custom_call.1} parent=1 // pred_check_branch
      %45 = sbr.rel (0) target = $region21
    $region20: #{tpu_custom_call.1} parent=1 // pred_region
      %s47 = ssub.s32 512, 512
      %48 = vsyncadd [#allocation5], %s47
      %s49 = sshll.u32 [#allocation6], 4
      %s50 = int_to_ptr.vmem [resolvable:$true] %s49
      %55 = dma.hbm_to_vmem [thread:$0]  %s4, 512, %s50, [#allocation5], 128, 128, 8
    $region21: #{tpu_custom_call.1} parent=1 // pred_fallthru
      _
    // Predicated region
    $region22: #{tpu_custom_call.1} parent=1 // pred_check
      _
    $region23: #{tpu_custom_call.1} parent=1 // pred_check_branch
      %57 = sbr.rel (0) target = $region25
    $region24: #{tpu_custom_call.1} parent=1 // pred_region
      _
    $region25: #{tpu_custom_call.1} parent=1 // pred_fallthru
      _
    // Predicated region
    $region26: #{tpu_custom_call.1} parent=1 // pred_check
      _
    $region27: #{tpu_custom_call.1} parent=1 // pred_check_branch
      %59 = sbr.rel (0) target = $region29
    $region28: #{tpu_custom_call.1} parent=1 // pred_region
      %s61 = ssub.s32 512, 512
      %62 = vsyncadd [#allocation8], %s61
      %s63 = sshll.u32 [#allocation7], 4
      %s64 = int_to_ptr.vmem [resolvable:$true] %s63
      %69 = dma.hbm_to_vmem [thread:$0]  %s6, 512, %s64, [#allocation8], 128, 128, 8
    $region29: #{tpu_custom_call.1} parent=1 // pred_fallthru
      _
    // Predicated region
    $region30: #{tpu_custom_call.1} parent=1 // pred_check
      _
    $region31: #{tpu_custom_call.1} parent=1 // pred_check_branch
      %71 = sbr.rel (0) target = $region33
    $region32: #{tpu_custom_call.1} parent=1 // pred_region
      _
    $region33: #{tpu_custom_call.1} parent=1 // pred_fallthru
      _
    // Predicated region
    $region34: #{tpu_custom_call.1} parent=1 // pred_check
      _
    $region35: #{tpu_custom_call.1} parent=1 // pred_check_branch
      %73 = sbr.rel (0) target = $region37
    $region36: #{tpu_custom_call.1} parent=1 // pred_region
      _
    $region37: #{tpu_custom_call.1} parent=1 // pred_fallthru
      _
    // Predicated region
    $region38: #{tpu_custom_call.1} parent=1 // pred_check
      _
    $region39: #{tpu_custom_call.1} parent=1 // pred_check_branch
      %75 = sbr.rel (0) target = $region41
    $region40: #{tpu_custom_call.1} parent=1 // pred_region
      _
    $region41: #{tpu_custom_call.1} parent=1 // pred_fallthru
      _
    // Predicated region
    $region42: #{tpu_custom_call.1} parent=1 // pred_check
      _
    $region43: #{tpu_custom_call.1} parent=1 // pred_check_branch
      %77 = sbr.rel (0) target = $region45
    $region44: #{tpu_custom_call.1} parent=1 // pred_region
      _
    $region45: #{tpu_custom_call.1} parent=1 // pred_fallthru
      _
    // Predicated region
    $region46: #{tpu_custom_call.1} parent=1 // pred_check
      _
    $region47: #{tpu_custom_call.1} parent=1 // pred_check_branch
      %79 = sbr.rel (0) target = $region49
    $region48: #{tpu_custom_call.1} parent=1 // pred_region
      _
    $region49: #{tpu_custom_call.1} parent=1 // pred_fallthru
      _
    // Predicated region
    $region50: #{tpu_custom_call.1} parent=1 // pred_check
      _
    $region51: #{tpu_custom_call.1} parent=1 // pred_check_branch
      %81 = sbr.rel (0) target = $region53
    $region52: #{tpu_custom_call.1} parent=1 // pred_region
      %82 = dma.done [#allocation3], 128
    $region53: #{tpu_custom_call.1} parent=1 // pred_fallthru
      _
    // Predicated region
    $region54: #{tpu_custom_call.1} parent=1 // pred_check
      _
    $region55: #{tpu_custom_call.1} parent=1 // pred_check_branch
      %84 = sbr.rel (0) target = $region57
    $region56: #{tpu_custom_call.1} parent=1 // pred_region
      %85 = dma.done [#allocation5], 64
    $region57: #{tpu_custom_call.1} parent=1 // pred_fallthru
      _
    // Predicated region
    $region58: #{tpu_custom_call.1} parent=1 // pred_check
      _
    $region59: #{tpu_custom_call.1} parent=1 // pred_check_branch
      %87 = sbr.rel (0) target = $region61
    $region60: #{tpu_custom_call.1} parent=1 // pred_region
      %88 = dma.done [#allocation5], 512
    $region61: #{tpu_custom_call.1} parent=1 // pred_fallthru
      _
    // Predicated region
    $region62: #{tpu_custom_call.1} parent=1 // pred_check
      _
    $region63: #{tpu_custom_call.1} parent=1 // pred_check_branch
      %90 = sbr.rel (0) target = $region65
    $region64: #{tpu_custom_call.1} parent=1 // pred_region
      %91 = dma.done [#allocation8], 512
    $region65: #{tpu_custom_call.1} parent=1 // pred_fallthru
      _
    %v93 = vld [vmem:[#allocation2] sm:$0xff]
    %v94 = vunpack.c.0.s8 %v93
    %v95 = vunpack.c.1.s8 %v93
    %v96 = vunpack.c.2.s8 %v93
    %v97 = vunpack.c.3.s8 %v93
    %v98 = vcvt.s32.f32 %v94
    %v99 = vcvt.s32.f32 %v95
    %v100 = vcvt.s32.f32 %v96
    %v101 = vcvt.s32.f32 %v97
    %vm102 = vcmp.gt.f32.partialorder %v98, 0.0
    %vm103 = vcmp.gt.f32.partialorder %v99, 0.0
    %vm104 = vcmp.gt.f32.partialorder %v100, 0.0
    %vm105 = vcmp.gt.f32.partialorder %v101, 0.0
    %v106 = vsel %vm102, 0.0, -1e+30
    %v107 = vsel %vm103, 0.0, -1e+30
    %v108 = vsel %vm104, 0.0, -1e+30
    %v109 = vsel %vm105, 0.0, -1e+30
    %v110 = vld [vmem:[%s1] sm:$0xff]
    %v111 = vld [vmem:[%s1 + $0x8] sm:$0xff]
    %v112 = vld [vmem:[%s1 + $0x10] sm:$0xff]
    %v113 = vld [vmem:[%s1 + $0x18] sm:$0xff]
    %v114 = vld [vmem:[%s2] sm:$0xff]
    %v115 = vld [vmem:[%s2 + $0x8] sm:$0xff]
    %v116 = vld [vmem:[%s2 + $0x10] sm:$0xff]
    %v117 = vld [vmem:[%s2 + $0x18] sm:$0xff]
    %v118 = vld [vmem:[#allocation4] sm:$0xf]
    %vm119 = vcmask 261120
    %v121 = vsel %vm119, %v110, 0
    %v124 = vsel %vm119, %v111, 0
    %v127 = vsel %vm119, %v112, 0
    %v130 = vsel %vm119, %v113, 0
    %132 = vmatprep.subr.mxu0 0.0
    %133 = vmatpush1.msra.mxu0 %v114
    %134 = vmatprep.subr.mxu0 0.0
    %135 = vmatpush1.msra.mxu0 %v115
    %136 = vmatprep.subr.mxu0 0.0
    %137 = vmatpush1.msra.mxu0 %v116
    %138 = vmatprep.subr.mxu0 0.0
    %139 = vmatpush1.msra.mxu0 %v117
    %140 = vmatprep.subr.mxu0 0.0
    %141 = vmatpush1.msra.mxu0 0.0
    %142 = vmatprep.subr.mxu0 0.0
    %143 = vmatpush1.msra.mxu0 0.0
    %144 = vmatprep.subr.mxu0 0.0
    %145 = vmatpush1.msra.mxu0 0.0
    %146 = vmatprep.subr.mxu0 0.0
    %147 = vmatpush1.msra.mxu0 0.0
    %148 = vmatprep.subr.mxu0 0.0
    %149 = vmatpush1.msra.mxu0 0.0
    %150 = vmatprep.subr.mxu0 0.0
    %151 = vmatpush1.msra.mxu0 0.0
    %152 = vmatprep.subr.mxu0 0.0
    %153 = vmatpush1.msra.mxu0 0.0
    %154 = vmatprep.subr.mxu0 0.0
    %155 = vmatpush1.msra.mxu0 0.0
    %156 = vmatprep.subr.mxu0 0.0
    %157 = vmatpush1.msra.mxu0 0.0
    %158 = vmatprep.subr.mxu0 0.0
    %159 = vmatpush1.msra.mxu0 0.0
    %160 = vmatprep.subr.mxu0 0.0
    %161 = vmatpush1.msra.mxu0 0.0
    %162 = vmatprep.subr.mxu0 0.0
    %163 = vmatpush1.msra.mxu0 0.0
    %164 = vmatprep.subr.mxu0 0.0
    %165 = vmatpush1.msra.mxu0 0.0
    %166 = vmatprep.subr.mxu0 0.0
    %167 = vmatpush1.msra.mxu0 0.0
    %168 = vmatprep.subr.mxu0 0.0
    %169 = vmatpush1.msra.mxu0 0.0
    %170 = vmatprep.subr.mxu0 0.0
    %171 = vmatpush1.msra.mxu0 0.0
    %172 = vmatprep.subr.mxu0 0.0
    %173 = vmatpush1.msra.mxu0 0.0
    %174 = vmatprep.subr.mxu0 0.0
    %175 = vmatpush1.msra.mxu0 0.0
    %176 = vmatprep.subr.mxu0 0.0
    %177 = vmatpush1.msra.mxu0 0.0
    %178 = vmatprep.subr.mxu0 0.0
    %179 = vmatpush1.msra.mxu0 0.0
    %180 = vmatprep.subr.mxu0 0.0
    %181 = vmatpush1.msra.mxu0 0.0
    %182 = vmatprep.subr.mxu0 0.0
    %183 = vmatpush1.msra.mxu0 0.0
    %184 = vmatprep.subr.mxu0 0.0
    %185 = vmatpush1.msra.mxu0 0.0
    %186 = vmatprep.subr.mxu0 0.0
    %187 = vmatpush1.msra.mxu0 0.0
    %188 = vmatprep.subr.mxu0 0.0
    %189 = vmatpush1.msra.mxu0 0.0
    %190 = vmatprep.subr.mxu0 0.0
    %191 = vmatpush1.msra.mxu0 0.0
    %192 = vmatprep.subr.mxu0 0.0
    %193 = vmatpush1.msra.mxu0 0.0
    %194 = vmatprep.subr.mxu0 0.0
    %195 = vmatpush1.msra.mxu0 0.0
    %196 = vmatprep.mubr.f32.mxu0 0.0
    %197 = vmatmul.mubr.f32.gmra.mrb[0].mxu0 %v121
    %v198 = vpop.f32.mrb[0].mxu0
    %v199 = vadd.f32 0.0, %v198
    %v200 = vpop.f32.mrb[0].mxu0
    %201 = vmatprep.mubr.f32.mxu0 0.0
    %202 = vmatmul.mubr.f32.gmra.mrb[0].mxu0 %v124
    %v203 = vpop.f32.mrb[0].mxu0
    %v204 = vadd.f32 0.0, %v203
    %v205 = vpop.f32.mrb[0].mxu0
    %206 = vmatprep.mubr.f32.mxu0 0.0
    %207 = vmatmul.mubr.f32.gmra.mrb[0].mxu0 %v127
    %v208 = vpop.f32.mrb[0].mxu0
    %v209 = vadd.f32 0.0, %v208
    %v210 = vpop.f32.mrb[0].mxu0
    %211 = vmatprep.mubr.f32.mxu0 0.0
    %212 = vmatmul.mubr.f32.gmra.mrb[0].mxu0 %v130
    %v213 = vpop.f32.mrb[0].mxu0
    %v214 = vadd.f32 0.0, %v213
    %v215 = vpop.f32.mrb[0].mxu0
    %216 = vdwg.mxu0
    %v218 = vsel %vm119, %v118, 0
    %220 = vmatprep.subr.mxu0 0.0
    %221 = vmatpush1.xpose.msra.mxu0 %v121
    %222 = vmatprep.subr.mxu0 0.0
    %223 = vmatpush1.xpose.msra.mxu0 %v124
    %224 = vmatprep.subr.mxu0 0.0
    %225 = vmatpush1.xpose.msra.mxu0 %v127
    %226 = vmatprep.subr.mxu0 0.0
    %227 = vmatpush1.xpose.msra.mxu0 %v130
    %228 = vmatprep.subr.mxu0 0.0
    %229 = vmatpush1.xpose.msra.mxu0 0.0
    %230 = vmatprep.subr.mxu0 0.0
    %231 = vmatpush1.xpose.msra.mxu0 0.0
    %232 = vmatprep.subr.mxu0 0.0
    %233 = vmatpush1.xpose.msra.mxu0 0.0
    %234 = vmatprep.subr.mxu0 0.0
    %235 = vmatpush1.xpose.msra.mxu0 0.0
    %236 = vmatprep.subr.mxu0 0.0
    %237 = vmatpush1.xpose.msra.mxu0 0.0
    %238 = vmatprep.subr.mxu0 0.0
    %239 = vmatpush1.xpose.msra.mxu0 0.0
    %240 = vmatprep.subr.mxu0 0.0
    %241 = vmatpush1.xpose.msra.mxu0 0.0
    %242 = vmatprep.subr.mxu0 0.0
    %243 = vmatpush1.xpose.msra.mxu0 0.0
    %244 = vmatprep.subr.mxu0 0.0
    %245 = vmatpush1.xpose.msra.mxu0 0.0
    %246 = vmatprep.subr.mxu0 0.0
    %247 = vmatpush1.xpose.msra.mxu0 0.0
    %248 = vmatprep.subr.mxu0 0.0
    %249 = vmatpush1.xpose.msra.mxu0 0.0
    %250 = vmatprep.subr.mxu0 0.0
    %251 = vmatpush1.xpose.msra.mxu0 0.0
    %252 = vmatprep.subr.mxu0 0.0
    %253 = vmatpush1.xpose.msra.mxu0 0.0
    %254 = vmatprep.subr.mxu0 0.0
    %255 = vmatpush1.xpose.msra.mxu0 0.0
    %256 = vmatprep.subr.mxu0 0.0
    %257 = vmatpush1.xpose.msra.mxu0 0.0
    %258 = vmatprep.subr.mxu0 0.0
    %259 = vmatpush1.xpose.msra.mxu0 0.0
    %260 = vmatprep.subr.mxu0 0.0
    %261 = vmatpush1.xpose.msra.mxu0 0.0
    %262 = vmatprep.subr.mxu0 0.0
    %263 = vmatpush1.xpose.msra.mxu0 0.0
    %264 = vmatprep.subr.mxu0 0.0
    %265 = vmatpush1.xpose.msra.mxu0 0.0
    %266 = vmatprep.subr.mxu0 0.0
    %267 = vmatpush1.xpose.msra.mxu0 0.0
    %268 = vmatprep.subr.mxu0 0.0
    %269 = vmatpush1.xpose.msra.mxu0 0.0
    %270 = vmatprep.subr.mxu0 0.0
    %271 = vmatpush1.xpose.msra.mxu0 0.0
    %272 = vmatprep.subr.mxu0 0.0
    %273 = vmatpush1.xpose.msra.mxu0 0.0
    %274 = vmatprep.subr.mxu0 0.0
    %275 = vmatpush1.xpose.msra.mxu0 0.0
    %276 = vmatprep.subr.mxu0 0.0
    %277 = vmatpush1.xpose.msra.mxu0 0.0
    %278 = vmatprep.subr.mxu0 0.0
    %279 = vmatpush1.xpose.msra.mxu0 0.0
    %280 = vmatprep.subr.mxu0 0.0
    %281 = vmatpush1.xpose.msra.mxu0 0.0
    %282 = vmatprep.subr.mxu0 0.0
    %283 = vmatpush1.xpose.msra.mxu0 0.0
    %284 = vmatprep.mubr.f32.mxu0 0.0
    %285 = vmatmul.mubr.f32.gmra.mrb[0].mxu0 %v218
    %v286 = vpop.f32.mrb[0].mxu0
    %v287 = vadd.f32 0.0, %v286
    %v288 = vpop.f32.mrb[0].mxu0
    %289 = vdwg.mxu0
    %291 = vset.pattern.permute.xlu0 32
    %292 = vperm.xlu0 %291, %v199
    %v293 = vpop.permute.xlu0 %292
    %296 = vset.pattern.permute.xlu0 32
    %297 = vperm.xlu0 %296, %v204
    %v298 = vpop.permute.xlu0 %297
    %301 = vset.pattern.permute.xlu0 32
    %302 = vperm.xlu0 %301, %v209
    %v303 = vpop.permute.xlu0 %302
    %306 = vset.pattern.permute.xlu0 32
    %307 = vperm.xlu0 %306, %v214
    %v308 = vpop.permute.xlu0 %307
    %v310 = vlaneseq
    %v311 = vshrl.u32 %v310, 7
    %v312 = vsub.s32 0, %v311
    %v313 = vrot.slane %v287, %v312
    %v314 = vadd.f32 %v293, %v313
    %v315 = vadd.f32 %v298, %v313
    %v316 = vadd.f32 %v303, %v313
    %v317 = vadd.f32 %v308, %v313
    %v318 = vmul.f32 %v314, 0.2
    %v319 = vmul.f32 %v315, 0.2
    %v320 = vmul.f32 %v316, 0.2
    %v321 = vmul.f32 %v317, 0.2
    %v322 = vmax.f32 %v314, %v318
    %v323 = vmax.f32 %v315, %v319
    %v324 = vmax.f32 %v316, %v320
    %v325 = vmax.f32 %v317, %v321
    %v326 = vadd.f32 %v322, %v106
    %v327 = vadd.f32 %v323, %v107
    %v328 = vadd.f32 %v324, %v108
    %v329 = vadd.f32 %v325, %v109
    %v330 = vsel %vm119, %v326, -inf
    %331 = vmax.xlane.f32.xlu0 %v330
    %v332 = vpop.xlane.xlu0 %331
    %v333 = vsel %vm119, %v327, -inf
    %334 = vmax.xlane.f32.xlu0 %v333
    %v335 = vpop.xlane.xlu0 %334
    %v336 = vsel %vm119, %v328, -inf
    %337 = vmax.xlane.f32.xlu0 %v336
    %v338 = vpop.xlane.xlu0 %337
    %v339 = vsel %vm119, %v329, -inf
    %340 = vmax.xlane.f32.xlu0 %v339
    %v341 = vpop.xlane.xlu0 %340
    %v342 = vsub.f32 %v326, %v332
    %v343 = vsub.f32 %v327, %v335
    %v344 = vsub.f32 %v328, %v338
    %v345 = vsub.f32 %v329, %v341
    %v346 = vmul.f32 %v342, 1.442695
    %v347 = vpow.pop %v346
    %v348 = vmul.f32 %v343, 1.442695
    %v349 = vpow.pop %v348
    %v350 = vmul.f32 %v344, 1.442695
    %v351 = vpow.pop %v350
    %v352 = vmul.f32 %v345, 1.442695
    %v353 = vpow.pop %v352
    %v354 = vsel %vm119, %v347, 0.0
    %355 = vadd.xlane.f32.xlu0 %v354
    %v356 = vpop.xlane.xlu0 %355
    %v357 = vsel %vm119, %v349, 0.0
    %358 = vadd.xlane.f32.xlu0 %v357
    %v359 = vpop.xlane.xlu0 %358
    %v360 = vsel %vm119, %v351, 0.0
    %361 = vadd.xlane.f32.xlu0 %v360
    %v362 = vpop.xlane.xlu0 %361
    %v363 = vsel %vm119, %v353, 0.0
    %364 = vadd.xlane.f32.xlu0 %v363
    %v365 = vpop.xlane.xlu0 %364
    %v366 = vrcp.pop %v356
    %v367 = vrcp.pop %v359
    %v368 = vrcp.pop %v362
    %v369 = vrcp.pop %v365
    %v370 = vmul.f32 %v347, %v366
    %v371 = vmul.f32 %v349, %v367
    %v372 = vmul.f32 %v351, %v368
    %v373 = vmul.f32 %v353, %v369
    %v374 = vpack.c.bf16 %v371, %v370
    %v375 = vpack.c.bf16 %v373, %v372
    %v376 = vpack.c.bf16 %v204, %v199
    %v377 = vpack.c.bf16 %v214, %v209
    %v379 = vsel %vm119, %v374, 0
    %v382 = vsel %vm119, %v375, 0
    %384 = vmatprep.subr.bf16.mxu0 0
    %385 = vmatpush1.bf16.msra.mxu0 %v376
    %386 = vmatprep.subr.bf16.mxu0 0
    %387 = vmatpush1.bf16.msra.mxu0 %v377
    %388 = vmatprep.subr.bf16.mxu0 0
    %389 = vmatpush1.bf16.msra.mxu0 0
    %390 = vmatprep.subr.bf16.mxu0 0
    %391 = vmatpush1.bf16.msra.mxu0 0
    %392 = vmatprep.subr.bf16.mxu0 0
    %393 = vmatpush1.bf16.msra.mxu0 0
    %394 = vmatprep.subr.bf16.mxu0 0
    %395 = vmatpush1.bf16.msra.mxu0 0
    %396 = vmatprep.subr.bf16.mxu0 0
    %397 = vmatpush1.bf16.msra.mxu0 0
    %398 = vmatprep.subr.bf16.mxu0 0
    %399 = vmatpush1.bf16.msra.mxu0 0
    %400 = vmatprep.subr.bf16.mxu0 0
    %401 = vmatpush1.bf16.msra.mxu0 0
    %402 = vmatprep.subr.bf16.mxu0 0
    %403 = vmatpush1.bf16.msra.mxu0 0
    %404 = vmatprep.subr.bf16.mxu0 0
    %405 = vmatpush1.bf16.msra.mxu0 0
    %406 = vmatprep.subr.bf16.mxu0 0
    %407 = vmatpush1.bf16.msra.mxu0 0
    %408 = vmatprep.subr.bf16.mxu0 0
    %409 = vmatpush1.bf16.msra.mxu0 0
    %410 = vmatprep.subr.bf16.mxu0 0
    %411 = vmatpush1.bf16.msra.mxu0 0
    %412 = vmatprep.subr.bf16.mxu0 0
    %413 = vmatpush1.bf16.msra.mxu0 0
    %414 = vmatprep.subr.bf16.mxu0 0
    %415 = vmatpush1.bf16.msra.mxu0 0
    %416 = vmatprep.mubr.bf16.mxu0 0
    %417 = vmatmul.mubr.bf16.gmra.mrb[0].mxu0 %v379
    %v418 = vpop.f32.mrb[0].mxu0
    %v419 = vadd.f32 0.0, %v418
    %v420 = vpop.f32.mrb[0].mxu0
    %v421 = vpop.f32.mrb[0].mxu0
    %v422 = vadd.f32 0.0, %v421
    %v423 = vpop.f32.mrb[0].mxu0
    %424 = vmatprep.mubr.bf16.mxu0 0
    %425 = vmatmul.mubr.bf16.gmra.mrb[0].mxu0 %v382
    %v426 = vpop.f32.mrb[0].mxu0
    %v427 = vadd.f32 0.0, %v426
    %v428 = vpop.f32.mrb[0].mxu0
    %v429 = vpop.f32.mrb[0].mxu0
    %v430 = vadd.f32 0.0, %v429
    %v431 = vpop.f32.mrb[0].mxu0
    %432 = vdwg.mxu0
    %433 = vset.pattern.permute.xlu0 33
    %434 = vperm.xlu0 %433, %v199
    %v435 = vpop.permute.xlu0 %434
    %437 = vset.pattern.permute.xlu0 33
    %438 = vperm.xlu0 %437, %v204
    %v439 = vpop.permute.xlu0 %438
    %441 = vset.pattern.permute.xlu0 33
    %442 = vperm.xlu0 %441, %v209
    %v443 = vpop.permute.xlu0 %442
    %445 = vset.pattern.permute.xlu0 33
    %446 = vperm.xlu0 %445, %v214
    %v447 = vpop.permute.xlu0 %446
    %v449 = vlaneseq
    %v450 = vshrl.u32 %v449, 7
    %v451 = vsub.s32 1, %v450
    %v452 = vrot.slane %v287, %v451
    %v453 = vadd.f32 %v435, %v452
    %v454 = vadd.f32 %v439, %v452
    %v455 = vadd.f32 %v443, %v452
    %v456 = vadd.f32 %v447, %v452
    %v457 = vmul.f32 %v453, 0.2
    %v458 = vmul.f32 %v454, 0.2
    %v459 = vmul.f32 %v455, 0.2
    %v460 = vmul.f32 %v456, 0.2
    %v461 = vmax.f32 %v453, %v457
    %v462 = vmax.f32 %v454, %v458
    %v463 = vmax.f32 %v455, %v459
    %v464 = vmax.f32 %v456, %v460
    %v465 = vadd.f32 %v461, %v106
    %v466 = vadd.f32 %v462, %v107
    %v467 = vadd.f32 %v463, %v108
    %v468 = vadd.f32 %v464, %v109
    %v469 = vsel %vm119, %v465, -inf
    %470 = vmax.xlane.f32.xlu0 %v469
    %v471 = vpop.xlane.xlu0 %470
    %v472 = vsel %vm119, %v466, -inf
    %473 = vmax.xlane.f32.xlu0 %v472
    %v474 = vpop.xlane.xlu0 %473
    %v475 = vsel %vm119, %v467, -inf
    %476 = vmax.xlane.f32.xlu0 %v475
    %v477 = vpop.xlane.xlu0 %476
    %v478 = vsel %vm119, %v468, -inf
    %479 = vmax.xlane.f32.xlu0 %v478
    %v480 = vpop.xlane.xlu0 %479
    %v481 = vsub.f32 %v465, %v471
    %v482 = vsub.f32 %v466, %v474
    %v483 = vsub.f32 %v467, %v477
    %v484 = vsub.f32 %v468, %v480
    %v485 = vmul.f32 %v481, 1.442695
    %v486 = vpow.pop %v485
    %v487 = vmul.f32 %v482, 1.442695
    %v488 = vpow.pop %v487
    %v489 = vmul.f32 %v483, 1.442695
    %v490 = vpow.pop %v489
    %v491 = vmul.f32 %v484, 1.442695
    %v492 = vpow.pop %v491
    %v493 = vsel %vm119, %v486, 0.0
    %494 = vadd.xlane.f32.xlu0 %v493
    %v495 = vpop.xlane.xlu0 %494
    %v496 = vsel %vm119, %v488, 0.0
    %497 = vadd.xlane.f32.xlu0 %v496
    %v498 = vpop.xlane.xlu0 %497
    %v499 = vsel %vm119, %v490, 0.0
    %500 = vadd.xlane.f32.xlu0 %v499
    %v501 = vpop.xlane.xlu0 %500
    %v502 = vsel %vm119, %v492, 0.0
    %503 = vadd.xlane.f32.xlu0 %v502
    %v504 = vpop.xlane.xlu0 %503
    %v505 = vrcp.pop %v495
    %v506 = vrcp.pop %v498
    %v507 = vrcp.pop %v501
    %v508 = vrcp.pop %v504
    %v509 = vmul.f32 %v486, %v505
    %v510 = vmul.f32 %v488, %v506
    %v511 = vmul.f32 %v490, %v507
    %v512 = vmul.f32 %v492, %v508
    %v513 = vpack.c.bf16 %v510, %v509
    %v514 = vpack.c.bf16 %v512, %v511
    %517 = vrot.lane.b32.xlu0 %v376, 120
    %v518 = vpop.permute.xlu0 %517
    %519 = vrot.lane.b32.xlu0 %v377, 120
    %v520 = vpop.permute.xlu0 %519
    %v524 = vsel %vm119, %v513, 0
    %v527 = vsel %vm119, %v514, 0
    %529 = vmatprep.subr.bf16.mxu0 0
    %530 = vmatpush1.bf16.msra.mxu0 %v518
    %531 = vmatprep.subr.bf16.mxu0 0
    %532 = vmatpush1.bf16.msra.mxu0 %v520
    %533 = vmatprep.subr.bf16.mxu0 0
    %534 = vmatpush1.bf16.msra.mxu0 0
    %535 = vmatprep.subr.bf16.mxu0 0
    %536 = vmatpush1.bf16.msra.mxu0 0
    %537 = vmatprep.subr.bf16.mxu0 0
    %538 = vmatpush1.bf16.msra.mxu0 0
    %539 = vmatprep.subr.bf16.mxu0 0
    %540 = vmatpush1.bf16.msra.mxu0 0
    %541 = vmatprep.subr.bf16.mxu0 0
    %542 = vmatpush1.bf16.msra.mxu0 0
    %543 = vmatprep.subr.bf16.mxu0 0
    %544 = vmatpush1.bf16.msra.mxu0 0
    %545 = vmatprep.subr.bf16.mxu0 0
    %546 = vmatpush1.bf16.msra.mxu0 0
    %547 = vmatprep.subr.bf16.mxu0 0
    %548 = vmatpush1.bf16.msra.mxu0 0
    %549 = vmatprep.subr.bf16.mxu0 0
    %550 = vmatpush1.bf16.msra.mxu0 0
    %551 = vmatprep.subr.bf16.mxu0 0
    %552 = vmatpush1.bf16.msra.mxu0 0
    %553 = vmatprep.subr.bf16.mxu0 0
    %554 = vmatpush1.bf16.msra.mxu0 0
    %555 = vmatprep.subr.bf16.mxu0 0
    %556 = vmatpush1.bf16.msra.mxu0 0
    %557 = vmatprep.subr.bf16.mxu0 0
    %558 = vmatpush1.bf16.msra.mxu0 0
    %559 = vmatprep.subr.bf16.mxu0 0
    %560 = vmatpush1.bf16.msra.mxu0 0
    %561 = vmatprep.mubr.bf16.mxu0 0
    %562 = vmatmul.mubr.bf16.gmra.mrb[0].mxu0 %v524
    %v563 = vpop.f32.mrb[0].mxu0
    %v564 = vadd.f32 0.0, %v563
    %v565 = vpop.f32.mrb[0].mxu0
    %v566 = vpop.f32.mrb[0].mxu0
    %v567 = vadd.f32 0.0, %v566
    %v568 = vpop.f32.mrb[0].mxu0
    %569 = vmatprep.mubr.bf16.mxu0 0
    %570 = vmatmul.mubr.bf16.gmra.mrb[0].mxu0 %v527
    %v571 = vpop.f32.mrb[0].mxu0
    %v572 = vadd.f32 0.0, %v571
    %v573 = vpop.f32.mrb[0].mxu0
    %v574 = vpop.f32.mrb[0].mxu0
    %v575 = vadd.f32 0.0, %v574
    %v576 = vpop.f32.mrb[0].mxu0
    %577 = vdwg.mxu0
    %578 = vset.pattern.permute.xlu0 34
    %579 = vperm.xlu0 %578, %v199
    %v580 = vpop.permute.xlu0 %579
    %582 = vset.pattern.permute.xlu0 34
    %583 = vperm.xlu0 %582, %v204
    %v584 = vpop.permute.xlu0 %583
    %586 = vset.pattern.permute.xlu0 34
    %587 = vperm.xlu0 %586, %v209
    %v588 = vpop.permute.xlu0 %587
    %590 = vset.pattern.permute.xlu0 34
    %591 = vperm.xlu0 %590, %v214
    %v592 = vpop.permute.xlu0 %591
    %v594 = vlaneseq
    %v595 = vshrl.u32 %v594, 7
    %v596 = vsub.s32 2, %v595
    %v597 = vrot.slane %v287, %v596
    %v598 = vadd.f32 %v580, %v597
    %v599 = vadd.f32 %v584, %v597
    %v600 = vadd.f32 %v588, %v597
    %v601 = vadd.f32 %v592, %v597
    %v602 = vmul.f32 %v598, 0.2
    %v603 = vmul.f32 %v599, 0.2
    %v604 = vmul.f32 %v600, 0.2
    %v605 = vmul.f32 %v601, 0.2
    %v606 = vmax.f32 %v598, %v602
    %v607 = vmax.f32 %v599, %v603
    %v608 = vmax.f32 %v600, %v604
    %v609 = vmax.f32 %v601, %v605
    %v610 = vadd.f32 %v606, %v106
    %v611 = vadd.f32 %v607, %v107
    %v612 = vadd.f32 %v608, %v108
    %v613 = vadd.f32 %v609, %v109
    %v614 = vsel %vm119, %v610, -inf
    %615 = vmax.xlane.f32.xlu0 %v614
    %v616 = vpop.xlane.xlu0 %615
    %v617 = vsel %vm119, %v611, -inf
    %618 = vmax.xlane.f32.xlu0 %v617
    %v619 = vpop.xlane.xlu0 %618
    %v620 = vsel %vm119, %v612, -inf
    %621 = vmax.xlane.f32.xlu0 %v620
    %v622 = vpop.xlane.xlu0 %621
    %v623 = vsel %vm119, %v613, -inf
    %624 = vmax.xlane.f32.xlu0 %v623
    %v625 = vpop.xlane.xlu0 %624
    %v626 = vsub.f32 %v610, %v616
    %v627 = vsub.f32 %v611, %v619
    %v628 = vsub.f32 %v612, %v622
    %v629 = vsub.f32 %v613, %v625
    %v630 = vmul.f32 %v626, 1.442695
    %v631 = vpow.pop %v630
    %v632 = vmul.f32 %v627, 1.442695
    %v633 = vpow.pop %v632
    %v634 = vmul.f32 %v628, 1.442695
    %v635 = vpow.pop %v634
    %v636 = vmul.f32 %v629, 1.442695
    %v637 = vpow.pop %v636
    %v638 = vsel %vm119, %v631, 0.0
    %639 = vadd.xlane.f32.xlu0 %v638
    %v640 = vpop.xlane.xlu0 %639
    %v641 = vsel %vm119, %v633, 0.0
    %642 = vadd.xlane.f32.xlu0 %v641
    %v643 = vpop.xlane.xlu0 %642
    %v644 = vsel %vm119, %v635, 0.0
    %645 = vadd.xlane.f32.xlu0 %v644
    %v646 = vpop.xlane.xlu0 %645
    %v647 = vsel %vm119, %v637, 0.0
    %648 = vadd.xlane.f32.xlu0 %v647
    %v649 = vpop.xlane.xlu0 %648
    %v650 = vrcp.pop %v640
    %v651 = vrcp.pop %v643
    %v652 = vrcp.pop %v646
    %v653 = vrcp.pop %v649
    %v654 = vmul.f32 %v631, %v650
    %v655 = vmul.f32 %v633, %v651
    %v656 = vmul.f32 %v635, %v652
    %v657 = vmul.f32 %v637, %v653
    %v658 = vpack.c.bf16 %v655, %v654
    %v659 = vpack.c.bf16 %v657, %v656
    %660 = vrot.lane.b32.xlu0 %v376, 112
    %v661 = vpop.permute.xlu0 %660
    %662 = vrot.lane.b32.xlu0 %v377, 112
    %v663 = vpop.permute.xlu0 %662
    %v667 = vsel %vm119, %v658, 0
    %v670 = vsel %vm119, %v659, 0
    %672 = vmatprep.subr.bf16.mxu0 0
    %673 = vmatpush1.bf16.msra.mxu0 %v661
    %674 = vmatprep.subr.bf16.mxu0 0
    %675 = vmatpush1.bf16.msra.mxu0 %v663
    %676 = vmatprep.subr.bf16.mxu0 0
    %677 = vmatpush1.bf16.msra.mxu0 0
    %678 = vmatprep.subr.bf16.mxu0 0
    %679 = vmatpush1.bf16.msra.mxu0 0
    %680 = vmatprep.subr.bf16.mxu0 0
    %681 = vmatpush1.bf16.msra.mxu0 0
    %682 = vmatprep.subr.bf16.mxu0 0
    %683 = vmatpush1.bf16.msra.mxu0 0
    %684 = vmatprep.subr.bf16.mxu0 0
    %685 = vmatpush1.bf16.msra.mxu0 0
    %686 = vmatprep.subr.bf16.mxu0 0
    %687 = vmatpush1.bf16.msra.mxu0 0
    %688 = vmatprep.subr.bf16.mxu0 0
    %689 = vmatpush1.bf16.msra.mxu0 0
    %690 = vmatprep.subr.bf16.mxu0 0
    %691 = vmatpush1.bf16.msra.mxu0 0
    %692 = vmatprep.subr.bf16.mxu0 0
    %693 = vmatpush1.bf16.msra.mxu0 0
    %694 = vmatprep.subr.bf16.mxu0 0
    %695 = vmatpush1.bf16.msra.mxu0 0
    %696 = vmatprep.subr.bf16.mxu0 0
    %697 = vmatpush1.bf16.msra.mxu0 0
    %698 = vmatprep.subr.bf16.mxu0 0
    %699 = vmatpush1.bf16.msra.mxu0 0
    %700 = vmatprep.subr.bf16.mxu0 0
    %701 = vmatpush1.bf16.msra.mxu0 0
    %702 = vmatprep.subr.bf16.mxu0 0
    %703 = vmatpush1.bf16.msra.mxu0 0
    %704 = vmatprep.mubr.bf16.mxu0 0
    %705 = vmatmul.mubr.bf16.gmra.mrb[0].mxu0 %v667
    %v706 = vpop.f32.mrb[0].mxu0
    %v707 = vadd.f32 0.0, %v706
    %v708 = vpop.f32.mrb[0].mxu0
    %v709 = vpop.f32.mrb[0].mxu0
    %v710 = vadd.f32 0.0, %v709
    %v711 = vpop.f32.mrb[0].mxu0
    %712 = vmatprep.mubr.bf16.mxu0 0
    %713 = vmatmul.mubr.bf16.gmra.mrb[0].mxu0 %v670
    %v714 = vpop.f32.mrb[0].mxu0
    %v715 = vadd.f32 0.0, %v714
    %v716 = vpop.f32.mrb[0].mxu0
    %v717 = vpop.f32.mrb[0].mxu0
    %v718 = vadd.f32 0.0, %v717
    %v719 = vpop.f32.mrb[0].mxu0
    %720 = vdwg.mxu0
    %721 = vset.pattern.permute.xlu0 35
    %722 = vperm.xlu0 %721, %v199
    %v723 = vpop.permute.xlu0 %722
    %725 = vset.pattern.permute.xlu0 35
    %726 = vperm.xlu0 %725, %v204
    %v727 = vpop.permute.xlu0 %726
    %729 = vset.pattern.permute.xlu0 35
    %730 = vperm.xlu0 %729, %v209
    %v731 = vpop.permute.xlu0 %730
    %733 = vset.pattern.permute.xlu0 35
    %734 = vperm.xlu0 %733, %v214
    %v735 = vpop.permute.xlu0 %734
    %v737 = vlaneseq
    %v738 = vshrl.u32 %v737, 7
    %v739 = vsub.s32 3, %v738
    %v740 = vrot.slane %v287, %v739
    %v741 = vadd.f32 %v723, %v740
    %v742 = vadd.f32 %v727, %v740
    %v743 = vadd.f32 %v731, %v740
    %v744 = vadd.f32 %v735, %v740
    %v745 = vmul.f32 %v741, 0.2
    %v746 = vmul.f32 %v742, 0.2
    %v747 = vmul.f32 %v743, 0.2
    %v748 = vmul.f32 %v744, 0.2
    %v749 = vmax.f32 %v741, %v745
    %v750 = vmax.f32 %v742, %v746
    %v751 = vmax.f32 %v743, %v747
    %v752 = vmax.f32 %v744, %v748
    %v753 = vadd.f32 %v749, %v106
    %v754 = vadd.f32 %v750, %v107
    %v755 = vadd.f32 %v751, %v108
    %v756 = vadd.f32 %v752, %v109
    %v757 = vsel %vm119, %v753, -inf
    %758 = vmax.xlane.f32.xlu0 %v757
    %v759 = vpop.xlane.xlu0 %758
    %v760 = vsel %vm119, %v754, -inf
    %761 = vmax.xlane.f32.xlu0 %v760
    %v762 = vpop.xlane.xlu0 %761
    %v763 = vsel %vm119, %v755, -inf
    %764 = vmax.xlane.f32.xlu0 %v763
    %v765 = vpop.xlane.xlu0 %764
    %v766 = vsel %vm119, %v756, -inf
    %767 = vmax.xlane.f32.xlu0 %v766
    %v768 = vpop.xlane.xlu0 %767
    %v769 = vsub.f32 %v753, %v759
    %v770 = vsub.f32 %v754, %v762
    %v771 = vsub.f32 %v755, %v765
    %v772 = vsub.f32 %v756, %v768
    %v773 = vmul.f32 %v769, 1.442695
    %v774 = vpow.pop %v773
    %v775 = vmul.f32 %v770, 1.442695
    %v776 = vpow.pop %v775
    %v777 = vmul.f32 %v771, 1.442695
    %v778 = vpow.pop %v777
    %v779 = vmul.f32 %v772, 1.442695
    %v780 = vpow.pop %v779
    %v781 = vsel %vm119, %v774, 0.0
    %782 = vadd.xlane.f32.xlu0 %v781
    %v783 = vpop.xlane.xlu0 %782
    %v784 = vsel %vm119, %v776, 0.0
    %785 = vadd.xlane.f32.xlu0 %v784
    %v786 = vpop.xlane.xlu0 %785
    %v787 = vsel %vm119, %v778, 0.0
    %788 = vadd.xlane.f32.xlu0 %v787
    %v789 = vpop.xlane.xlu0 %788
    %v790 = vsel %vm119, %v780, 0.0
    %791 = vadd.xlane.f32.xlu0 %v790
    %v792 = vpop.xlane.xlu0 %791
    %v793 = vrcp.pop %v783
    %v794 = vrcp.pop %v786
    %v795 = vrcp.pop %v789
    %v796 = vrcp.pop %v792
    %v797 = vmul.f32 %v774, %v793
    %v798 = vmul.f32 %v776, %v794
    %v799 = vmul.f32 %v778, %v795
    %v800 = vmul.f32 %v780, %v796
    %v801 = vpack.c.bf16 %v798, %v797
    %v802 = vpack.c.bf16 %v800, %v799
    %803 = vrot.lane.b32.xlu0 %v376, 104
    %v804 = vpop.permute.xlu0 %803
    %805 = vrot.lane.b32.xlu0 %v377, 104
    %v806 = vpop.permute.xlu0 %805
    %v810 = vsel %vm119, %v801, 0
    %v813 = vsel %vm119, %v802, 0
    %815 = vmatprep.subr.bf16.mxu0 0
    %816 = vmatpush1.bf16.msra.mxu0 %v804
    %817 = vmatprep.subr.bf16.mxu0 0
    %818 = vmatpush1.bf16.msra.mxu0 %v806
    %819 = vmatprep.subr.bf16.mxu0 0
    %820 = vmatpush1.bf16.msra.mxu0 0
    %821 = vmatprep.subr.bf16.mxu0 0
    %822 = vmatpush1.bf16.msra.mxu0 0
    %823 = vmatprep.subr.bf16.mxu0 0
    %824 = vmatpush1.bf16.msra.mxu0 0
    %825 = vmatprep.subr.bf16.mxu0 0
    %826 = vmatpush1.bf16.msra.mxu0 0
    %827 = vmatprep.subr.bf16.mxu0 0
    %828 = vmatpush1.bf16.msra.mxu0 0
    %829 = vmatprep.subr.bf16.mxu0 0
    %830 = vmatpush1.bf16.msra.mxu0 0
    %831 = vmatprep.subr.bf16.mxu0 0
    %832 = vmatpush1.bf16.msra.mxu0 0
    %833 = vmatprep.subr.bf16.mxu0 0
    %834 = vmatpush1.bf16.msra.mxu0 0
    %835 = vmatprep.subr.bf16.mxu0 0
    %836 = vmatpush1.bf16.msra.mxu0 0
    %837 = vmatprep.subr.bf16.mxu0 0
    %838 = vmatpush1.bf16.msra.mxu0 0
    %839 = vmatprep.subr.bf16.mxu0 0
    %840 = vmatpush1.bf16.msra.mxu0 0
    %841 = vmatprep.subr.bf16.mxu0 0
    %842 = vmatpush1.bf16.msra.mxu0 0
    %843 = vmatprep.subr.bf16.mxu0 0
    %844 = vmatpush1.bf16.msra.mxu0 0
    %845 = vmatprep.subr.bf16.mxu0 0
    %846 = vmatpush1.bf16.msra.mxu0 0
    %847 = vmatprep.mubr.bf16.mxu0 0
    %848 = vmatmul.mubr.bf16.gmra.mrb[0].mxu0 %v810
    %v849 = vpop.f32.mrb[0].mxu0
    %v850 = vadd.f32 0.0, %v849
    %v851 = vpop.f32.mrb[0].mxu0
    %v852 = vpop.f32.mrb[0].mxu0
    %v853 = vadd.f32 0.0, %v852
    %v854 = vpop.f32.mrb[0].mxu0
    %855 = vmatprep.mubr.bf16.mxu0 0
    %856 = vmatmul.mubr.bf16.gmra.mrb[0].mxu0 %v813
    %v857 = vpop.f32.mrb[0].mxu0
    %v858 = vadd.f32 0.0, %v857
    %v859 = vpop.f32.mrb[0].mxu0
    %v860 = vpop.f32.mrb[0].mxu0
    %v861 = vadd.f32 0.0, %v860
    %v862 = vpop.f32.mrb[0].mxu0
    %863 = vdwg.mxu0
    %868 = vrot.lane.b32.xlu0 %v564, 8
    %v869 = vpop.permute.xlu0 %868
    %870 = vrot.lane.b32.xlu0 %v567, 8
    %v871 = vpop.permute.xlu0 %870
    %872 = vrot.lane.b32.xlu0 %v572, 8
    %v873 = vpop.permute.xlu0 %872
    %874 = vrot.lane.b32.xlu0 %v575, 8
    %v875 = vpop.permute.xlu0 %874
    %884 = vrot.lane.b32.xlu0 %v707, 16
    %v885 = vpop.permute.xlu0 %884
    %886 = vrot.lane.b32.xlu0 %v710, 16
    %v887 = vpop.permute.xlu0 %886
    %888 = vrot.lane.b32.xlu0 %v715, 16
    %v889 = vpop.permute.xlu0 %888
    %890 = vrot.lane.b32.xlu0 %v718, 16
    %v891 = vpop.permute.xlu0 %890
    %900 = vrot.lane.b32.xlu0 %v850, 24
    %v901 = vpop.permute.xlu0 %900
    %902 = vrot.lane.b32.xlu0 %v853, 24
    %v903 = vpop.permute.xlu0 %902
    %904 = vrot.lane.b32.xlu0 %v858, 24
    %v905 = vpop.permute.xlu0 %904
    %906 = vrot.lane.b32.xlu0 %v861, 24
    %v907 = vpop.permute.xlu0 %906
    %vm912 = vcmask 64512
    %v913 = vsel %vm912, %v419, %v869
    %v914 = vsel %vm912, %v422, %v871
    %v915 = vsel %vm912, %v427, %v873
    %v916 = vsel %vm912, %v430, %v875
    %vm917 = vcmask 130048
    %v918 = vsel %vm917, %v913, %v885
    %v919 = vsel %vm917, %v914, %v887
    %v920 = vsel %vm917, %v915, %v889
    %v921 = vsel %vm917, %v916, %v891
    %vm922 = vcmask 195584
    %v923 = vsel %vm922, %v918, %v901
    %v924 = vsel %vm922, %v919, %v903
    %v925 = vsel %vm922, %v920, %v905
    %v926 = vsel %vm922, %v921, %v907
    %v927 = vsel %vm119, %v923, 0.0
    %v928 = vsel %vm119, %v924, 0.0
    %v929 = vadd.f32 %v927, %v928
    %v930 = vsel %vm119, %v925, 0.0
    %v931 = vadd.f32 %v929, %v930
    %v932 = vsel %vm119, %v926, 0.0
    %v933 = vadd.f32 %v931, %v932
    %v934 = vrot.slane %v933, 4
    %v935 = vadd.f32 %v933, %v934
    %v936 = vrot.slane %v935, 2
    %v937 = vadd.f32 %v935, %v936
    %v938 = vrot.slane %v937, 1
    %v939 = vadd.f32 %v937, %v938
    %v940 = vrcp.pop 32.0
    %v941 = vmul.f32 %v939, %v940
    %v942 = vsub.f32 %v923, %v941
    %v943 = vsub.f32 %v924, %v941
    %v944 = vsub.f32 %v925, %v941
    %v945 = vsub.f32 %v926, %v941
    %v946 = vmul.f32 %v942, %v942
    %v947 = vmul.f32 %v943, %v943
    %v948 = vmul.f32 %v944, %v944
    %v949 = vmul.f32 %v945, %v945
    %v950 = vsel %vm119, %v946, 0.0
    %v951 = vsel %vm119, %v947, 0.0
    %v952 = vadd.f32 %v950, %v951
    %v953 = vsel %vm119, %v948, 0.0
    %v954 = vadd.f32 %v952, %v953
    %v955 = vsel %vm119, %v949, 0.0
    %v956 = vadd.f32 %v954, %v955
    %v957 = vrot.slane %v956, 4
    %v958 = vadd.f32 %v956, %v957
    %v959 = vrot.slane %v958, 2
    %v960 = vadd.f32 %v958, %v959
    %v961 = vrot.slane %v960, 1
    %v962 = vadd.f32 %v960, %v961
    %v963 = vmul.f32 %v962, %v940
    %v964 = vadd.f32 %v963, 1e-05
    %v965 = vrsqrt.pop %v964
    %v966 = vmul.f32 %v942, %v965
    %v967 = vmul.f32 %v943, %v965
    %v968 = vmul.f32 %v944, %v965
    %v969 = vmul.f32 %v945, %v965
    %vm970 = vcmp.gt.f32.partialorder %v966, 0.0
    %vm971 = vcmp.gt.f32.partialorder %v967, 0.0
    %vm972 = vcmp.gt.f32.partialorder %v968, 0.0
    %vm973 = vcmp.gt.f32.partialorder %v969, 0.0
    %v974 = vmul.f32 %v966, 1.442695
    %v975 = vpow.pop %v974
    %v976 = vmul.f32 %v967, 1.442695
    %v977 = vpow.pop %v976
    %v978 = vmul.f32 %v968, 1.442695
    %v979 = vpow.pop %v978
    %v980 = vmul.f32 %v969, 1.442695
    %v981 = vpow.pop %v980
    %v982 = vsub.f32 %v975, 1.0
    %v983 = vsub.f32 %v977, 1.0
    %v984 = vsub.f32 %v979, 1.0
    %v985 = vsub.f32 %v981, 1.0
    %v986 = vsel %vm970, %v966, %v982
    %v987 = vsel %vm971, %v967, %v983
    %v988 = vsel %vm972, %v968, %v984
    %v989 = vsel %vm973, %v969, %v985
    %v990 = vadd.f32 %v986, %v110
    %v991 = vadd.f32 %v987, %v111
    %v992 = vadd.f32 %v988, %v112
    %v993 = vadd.f32 %v989, %v113
    %v994 = vld [vmem:[#allocation6] sm:$0xff]
    %v995 = vld [vmem:[#allocation6 + $0x8] sm:$0xff]
    %v996 = vld [vmem:[#allocation6 + $0x10] sm:$0xff]
    %v997 = vld [vmem:[#allocation6 + $0x18] sm:$0xff]
    %v998 = vld [vmem:[%s5] sm:$0xf]
    %v1000 = vsel %vm119, %v990, 0
    %v1003 = vsel %vm119, %v991, 0
    %v1006 = vsel %vm119, %v992, 0
    %v1009 = vsel %vm119, %v993, 0
    %1011 = vmatprep.subr.mxu0 0.0
    %1012 = vmatpush1.msra.mxu0 %v994
    %1013 = vmatprep.subr.mxu0 0.0
    %1014 = vmatpush1.msra.mxu0 %v995
    %1015 = vmatprep.subr.mxu0 0.0
    %1016 = vmatpush1.msra.mxu0 %v996
    %1017 = vmatprep.subr.mxu0 0.0
    %1018 = vmatpush1.msra.mxu0 %v997
    %1019 = vmatprep.subr.mxu0 0.0
    %1020 = vmatpush1.msra.mxu0 0.0
    %1021 = vmatprep.subr.mxu0 0.0
    %1022 = vmatpush1.msra.mxu0 0.0
    %1023 = vmatprep.subr.mxu0 0.0
    %1024 = vmatpush1.msra.mxu0 0.0
    %1025 = vmatprep.subr.mxu0 0.0
    %1026 = vmatpush1.msra.mxu0 0.0
    %1027 = vmatprep.subr.mxu0 0.0
    %1028 = vmatpush1.msra.mxu0 0.0
    %1029 = vmatprep.subr.mxu0 0.0
    %1030 = vmatpush1.msra.mxu0 0.0
    %1031 = vmatprep.subr.mxu0 0.0
    %1032 = vmatpush1.msra.mxu0 0.0
    %1033 = vmatprep.subr.mxu0 0.0
    %1034 = vmatpush1.msra.mxu0 0.0
    %1035 = vmatprep.subr.mxu0 0.0
    %1036 = vmatpush1.msra.mxu0 0.0
    %1037 = vmatprep.subr.mxu0 0.0
    %1038 = vmatpush1.msra.mxu0 0.0
    %1039 = vmatprep.subr.mxu0 0.0
    %1040 = vmatpush1.msra.mxu0 0.0
    %1041 = vmatprep.subr.mxu0 0.0
    %1042 = vmatpush1.msra.mxu0 0.0
    %1043 = vmatprep.subr.mxu0 0.0
    %1044 = vmatpush1.msra.mxu0 0.0
    %1045 = vmatprep.subr.mxu0 0.0
    %1046 = vmatpush1.msra.mxu0 0.0
    %1047 = vmatprep.subr.mxu0 0.0
    %1048 = vmatpush1.msra.mxu0 0.0
    %1049 = vmatprep.subr.mxu0 0.0
    %1050 = vmatpush1.msra.mxu0 0.0
    %1051 = vmatprep.subr.mxu0 0.0
    %1052 = vmatpush1.msra.mxu0 0.0
    %1053 = vmatprep.subr.mxu0 0.0
    %1054 = vmatpush1.msra.mxu0 0.0
    %1055 = vmatprep.subr.mxu0 0.0
    %1056 = vmatpush1.msra.mxu0 0.0
    %1057 = vmatprep.subr.mxu0 0.0
    %1058 = vmatpush1.msra.mxu0 0.0
    %1059 = vmatprep.subr.mxu0 0.0
    %1060 = vmatpush1.msra.mxu0 0.0
    %1061 = vmatprep.subr.mxu0 0.0
    %1062 = vmatpush1.msra.mxu0 0.0
    %1063 = vmatprep.subr.mxu0 0.0
    %1064 = vmatpush1.msra.mxu0 0.0
    %1065 = vmatprep.subr.mxu0 0.0
    %1066 = vmatpush1.msra.mxu0 0.0
    %1067 = vmatprep.subr.mxu0 0.0
    %1068 = vmatpush1.msra.mxu0 0.0
    %1069 = vmatprep.subr.mxu0 0.0
    %1070 = vmatpush1.msra.mxu0 0.0
    %1071 = vmatprep.subr.mxu0 0.0
    %1072 = vmatpush1.msra.mxu0 0.0
    %1073 = vmatprep.subr.mxu0 0.0
    %1074 = vmatpush1.msra.mxu0 0.0
    %1075 = vmatprep.mubr.f32.mxu0 0.0
    %1076 = vmatmul.mubr.f32.gmra.mrb[0].mxu0 %v1000
    %v1077 = vpop.f32.mrb[0].mxu0
    %v1078 = vadd.f32 0.0, %v1077
    %v1079 = vpop.f32.mrb[0].mxu0
    %1080 = vmatprep.mubr.f32.mxu0 0.0
    %1081 = vmatmul.mubr.f32.gmra.mrb[0].mxu0 %v1003
    %v1082 = vpop.f32.mrb[0].mxu0
    %v1083 = vadd.f32 0.0, %v1082
    %v1084 = vpop.f32.mrb[0].mxu0
    %1085 = vmatprep.mubr.f32.mxu0 0.0
    %1086 = vmatmul.mubr.f32.gmra.mrb[0].mxu0 %v1006
    %v1087 = vpop.f32.mrb[0].mxu0
    %v1088 = vadd.f32 0.0, %v1087
    %v1089 = vpop.f32.mrb[0].mxu0
    %1090 = vmatprep.mubr.f32.mxu0 0.0
    %1091 = vmatmul.mubr.f32.gmra.mrb[0].mxu0 %v1009
    %v1092 = vpop.f32.mrb[0].mxu0
    %v1093 = vadd.f32 0.0, %v1092
    %v1094 = vpop.f32.mrb[0].mxu0
    %1095 = vdwg.mxu0
    %v1097 = vsel %vm119, %v998, 0
    %1099 = vmatprep.subr.mxu0 0.0
    %1100 = vmatpush1.xpose.msra.mxu0 %v1000
    %1101 = vmatprep.subr.mxu0 0.0
    %1102 = vmatpush1.xpose.msra.mxu0 %v1003
    %1103 = vmatprep.subr.mxu0 0.0
    %1104 = vmatpush1.xpose.msra.mxu0 %v1006
    %1105 = vmatprep.subr.mxu0 0.0
    %1106 = vmatpush1.xpose.msra.mxu0 %v1009
    %1107 = vmatprep.subr.mxu0 0.0
    %1108 = vmatpush1.xpose.msra.mxu0 0.0
    %1109 = vmatprep.subr.mxu0 0.0
    %1110 = vmatpush1.xpose.msra.mxu0 0.0
    %1111 = vmatprep.subr.mxu0 0.0
    %1112 = vmatpush1.xpose.msra.mxu0 0.0
    %1113 = vmatprep.subr.mxu0 0.0
    %1114 = vmatpush1.xpose.msra.mxu0 0.0
    %1115 = vmatprep.subr.mxu0 0.0
    %1116 = vmatpush1.xpose.msra.mxu0 0.0
    %1117 = vmatprep.subr.mxu0 0.0
    %1118 = vmatpush1.xpose.msra.mxu0 0.0
    %1119 = vmatprep.subr.mxu0 0.0
    %1120 = vmatpush1.xpose.msra.mxu0 0.0
    %1121 = vmatprep.subr.mxu0 0.0
    %1122 = vmatpush1.xpose.msra.mxu0 0.0
    %1123 = vmatprep.subr.mxu0 0.0
    %1124 = vmatpush1.xpose.msra.mxu0 0.0
    %1125 = vmatprep.subr.mxu0 0.0
    %1126 = vmatpush1.xpose.msra.mxu0 0.0
    %1127 = vmatprep.subr.mxu0 0.0
    %1128 = vmatpush1.xpose.msra.mxu0 0.0
    %1129 = vmatprep.subr.mxu0 0.0
    %1130 = vmatpush1.xpose.msra.mxu0 0.0
    %1131 = vmatprep.subr.mxu0 0.0
    %1132 = vmatpush1.xpose.msra.mxu0 0.0
    %1133 = vmatprep.subr.mxu0 0.0
    %1134 = vmatpush1.xpose.msra.mxu0 0.0
    %1135 = vmatprep.subr.mxu0 0.0
    %1136 = vmatpush1.xpose.msra.mxu0 0.0
    %1137 = vmatprep.subr.mxu0 0.0
    %1138 = vmatpush1.xpose.msra.mxu0 0.0
    %1139 = vmatprep.subr.mxu0 0.0
    %1140 = vmatpush1.xpose.msra.mxu0 0.0
    %1141 = vmatprep.subr.mxu0 0.0
    %1142 = vmatpush1.xpose.msra.mxu0 0.0
    %1143 = vmatprep.subr.mxu0 0.0
    %1144 = vmatpush1.xpose.msra.mxu0 0.0
    %1145 = vmatprep.subr.mxu0 0.0
    %1146 = vmatpush1.xpose.msra.mxu0 0.0
    %1147 = vmatprep.subr.mxu0 0.0
    %1148 = vmatpush1.xpose.msra.mxu0 0.0
    %1149 = vmatprep.subr.mxu0 0.0
    %1150 = vmatpush1.xpose.msra.mxu0 0.0
    %1151 = vmatprep.subr.mxu0 0.0
    %1152 = vmatpush1.xpose.msra.mxu0 0.0
    %1153 = vmatprep.subr.mxu0 0.0
    %1154 = vmatpush1.xpose.msra.mxu0 0.0
    %1155 = vmatprep.subr.mxu0 0.0
    %1156 = vmatpush1.xpose.msra.mxu0 0.0
    %1157 = vmatprep.subr.mxu0 0.0
    %1158 = vmatpush1.xpose.msra.mxu0 0.0
    %1159 = vmatprep.subr.mxu0 0.0
    %1160 = vmatpush1.xpose.msra.mxu0 0.0
    %1161 = vmatprep.subr.mxu0 0.0
    %1162 = vmatpush1.xpose.msra.mxu0 0.0
    %1163 = vmatprep.mubr.f32.mxu0 0.0
    %1164 = vmatmul.mubr.f32.gmra.mrb[0].mxu0 %v1097
    %v1165 = vpop.f32.mrb[0].mxu0
    %v1166 = vadd.f32 0.0, %v1165
    %v1167 = vpop.f32.mrb[0].mxu0
    %1168 = vdwg.mxu0
    %1170 = vset.pattern.permute.xlu0 32
    %1171 = vperm.xlu0 %1170, %v1078
    %v1172 = vpop.permute.xlu0 %1171
    %1175 = vset.pattern.permute.xlu0 32
    %1176 = vperm.xlu0 %1175, %v1083
    %v1177 = vpop.permute.xlu0 %1176
    %1180 = vset.pattern.permute.xlu0 32
    %1181 = vperm.xlu0 %1180, %v1088
    %v1182 = vpop.permute.xlu0 %1181
    %1185 = vset.pattern.permute.xlu0 32
    %1186 = vperm.xlu0 %1185, %v1093
    %v1187 = vpop.permute.xlu0 %1186
    %v1189 = vlaneseq
    %v1190 = vshrl.u32 %v1189, 7
    %v1191 = vsub.s32 0, %v1190
    %v1192 = vrot.slane %v1166, %v1191
    %v1193 = vadd.f32 %v1172, %v1192
    %v1194 = vadd.f32 %v1177, %v1192
    %v1195 = vadd.f32 %v1182, %v1192
    %v1196 = vadd.f32 %v1187, %v1192
    %v1197 = vmul.f32 %v1193, 0.2
    %v1198 = vmul.f32 %v1194, 0.2
    %v1199 = vmul.f32 %v1195, 0.2
    %v1200 = vmul.f32 %v1196, 0.2
    %v1201 = vmax.f32 %v1193, %v1197
    %v1202 = vmax.f32 %v1194, %v1198
    %v1203 = vmax.f32 %v1195, %v1199
    %v1204 = vmax.f32 %v1196, %v1200
    %v1205 = vadd.f32 %v1201, %v106
    %v1206 = vadd.f32 %v1202, %v107
    %v1207 = vadd.f32 %v1203, %v108
    %v1208 = vadd.f32 %v1204, %v109
    %v1209 = vsel %vm119, %v1205, -inf
    %1210 = vmax.xlane.f32.xlu0 %v1209
    %v1211 = vpop.xlane.xlu0 %1210
    %v1212 = vsel %vm119, %v1206, -inf
    %1213 = vmax.xlane.f32.xlu0 %v1212
    %v1214 = vpop.xlane.xlu0 %1213
    %v1215 = vsel %vm119, %v1207, -inf
    %1216 = vmax.xlane.f32.xlu0 %v1215
    %v1217 = vpop.xlane.xlu0 %1216
    %v1218 = vsel %vm119, %v1208, -inf
    %1219 = vmax.xlane.f32.xlu0 %v1218
    %v1220 = vpop.xlane.xlu0 %1219
    %v1221 = vsub.f32 %v1205, %v1211
    %v1222 = vsub.f32 %v1206, %v1214
    %v1223 = vsub.f32 %v1207, %v1217
    %v1224 = vsub.f32 %v1208, %v1220
    %v1225 = vmul.f32 %v1221, 1.442695
    %v1226 = vpow.pop %v1225
    %v1227 = vmul.f32 %v1222, 1.442695
    %v1228 = vpow.pop %v1227
    %v1229 = vmul.f32 %v1223, 1.442695
    %v1230 = vpow.pop %v1229
    %v1231 = vmul.f32 %v1224, 1.442695
    %v1232 = vpow.pop %v1231
    %v1233 = vsel %vm119, %v1226, 0.0
    %1234 = vadd.xlane.f32.xlu0 %v1233
    %v1235 = vpop.xlane.xlu0 %1234
    %v1236 = vsel %vm119, %v1228, 0.0
    %1237 = vadd.xlane.f32.xlu0 %v1236
    %v1238 = vpop.xlane.xlu0 %1237
    %v1239 = vsel %vm119, %v1230, 0.0
    %1240 = vadd.xlane.f32.xlu0 %v1239
    %v1241 = vpop.xlane.xlu0 %1240
    %v1242 = vsel %vm119, %v1232, 0.0
    %1243 = vadd.xlane.f32.xlu0 %v1242
    %v1244 = vpop.xlane.xlu0 %1243
    %v1245 = vrcp.pop %v1235
    %v1246 = vrcp.pop %v1238
    %v1247 = vrcp.pop %v1241
    %v1248 = vrcp.pop %v1244
    %v1249 = vmul.f32 %v1226, %v1245
    %v1250 = vmul.f32 %v1228, %v1246
    %v1251 = vmul.f32 %v1230, %v1247
    %v1252 = vmul.f32 %v1232, %v1248
    %v1253 = vpack.c.bf16 %v1250, %v1249
    %v1254 = vpack.c.bf16 %v1252, %v1251
    %v1255 = vpack.c.bf16 %v1083, %v1078
    %v1256 = vpack.c.bf16 %v1093, %v1088
    %v1258 = vsel %vm119, %v1253, 0
    %v1261 = vsel %vm119, %v1254, 0
    %1263 = vmatprep.subr.bf16.mxu0 0
    %1264 = vmatpush1.bf16.msra.mxu0 %v1255
    %1265 = vmatprep.subr.bf16.mxu0 0
    %1266 = vmatpush1.bf16.msra.mxu0 %v1256
    %1267 = vmatprep.subr.bf16.mxu0 0
    %1268 = vmatpush1.bf16.msra.mxu0 0
    %1269 = vmatprep.subr.bf16.mxu0 0
    %1270 = vmatpush1.bf16.msra.mxu0 0
    %1271 = vmatprep.subr.bf16.mxu0 0
    %1272 = vmatpush1.bf16.msra.mxu0 0
    %1273 = vmatprep.subr.bf16.mxu0 0
    %1274 = vmatpush1.bf16.msra.mxu0 0
    %1275 = vmatprep.subr.bf16.mxu0 0
    %1276 = vmatpush1.bf16.msra.mxu0 0
    %1277 = vmatprep.subr.bf16.mxu0 0
    %1278 = vmatpush1.bf16.msra.mxu0 0
    %1279 = vmatprep.subr.bf16.mxu0 0
    %1280 = vmatpush1.bf16.msra.mxu0 0
    %1281 = vmatprep.subr.bf16.mxu0 0
    %1282 = vmatpush1.bf16.msra.mxu0 0
    %1283 = vmatprep.subr.bf16.mxu0 0
    %1284 = vmatpush1.bf16.msra.mxu0 0
    %1285 = vmatprep.subr.bf16.mxu0 0
    %1286 = vmatpush1.bf16.msra.mxu0 0
    %1287 = vmatprep.subr.bf16.mxu0 0
    %1288 = vmatpush1.bf16.msra.mxu0 0
    %1289 = vmatprep.subr.bf16.mxu0 0
    %1290 = vmatpush1.bf16.msra.mxu0 0
    %1291 = vmatprep.subr.bf16.mxu0 0
    %1292 = vmatpush1.bf16.msra.mxu0 0
    %1293 = vmatprep.subr.bf16.mxu0 0
    %1294 = vmatpush1.bf16.msra.mxu0 0
    %1295 = vmatprep.mubr.bf16.mxu0 0
    %1296 = vmatmul.mubr.bf16.gmra.mrb[0].mxu0 %v1258
    %v1297 = vpop.f32.mrb[0].mxu0
    %v1298 = vadd.f32 0.0, %v1297
    %v1299 = vpop.f32.mrb[0].mxu0
    %v1300 = vpop.f32.mrb[0].mxu0
    %v1301 = vadd.f32 0.0, %v1300
    %v1302 = vpop.f32.mrb[0].mxu0
    %1303 = vmatprep.mubr.bf16.mxu0 0
    %1304 = vmatmul.mubr.bf16.gmra.mrb[0].mxu0 %v1261
    %v1305 = vpop.f32.mrb[0].mxu0
    %v1306 = vadd.f32 0.0, %v1305
    %v1307 = vpop.f32.mrb[0].mxu0
    %v1308 = vpop.f32.mrb[0].mxu0
    %v1309 = vadd.f32 0.0, %v1308
    %v1310 = vpop.f32.mrb[0].mxu0
    %1311 = vdwg.mxu0
    %1312 = vset.pattern.permute.xlu0 33
    %1313 = vperm.xlu0 %1312, %v1078
    %v1314 = vpop.permute.xlu0 %1313
    %1316 = vset.pattern.permute.xlu0 33
    %1317 = vperm.xlu0 %1316, %v1083
    %v1318 = vpop.permute.xlu0 %1317
    %1320 = vset.pattern.permute.xlu0 33
    %1321 = vperm.xlu0 %1320, %v1088
    %v1322 = vpop.permute.xlu0 %1321
    %1324 = vset.pattern.permute.xlu0 33
    %1325 = vperm.xlu0 %1324, %v1093
    %v1326 = vpop.permute.xlu0 %1325
    %v1328 = vlaneseq
    %v1329 = vshrl.u32 %v1328, 7
    %v1330 = vsub.s32 1, %v1329
    %v1331 = vrot.slane %v1166, %v1330
    %v1332 = vadd.f32 %v1314, %v1331
    %v1333 = vadd.f32 %v1318, %v1331
    %v1334 = vadd.f32 %v1322, %v1331
    %v1335 = vadd.f32 %v1326, %v1331
    %v1336 = vmul.f32 %v1332, 0.2
    %v1337 = vmul.f32 %v1333, 0.2
    %v1338 = vmul.f32 %v1334, 0.2
    %v1339 = vmul.f32 %v1335, 0.2
    %v1340 = vmax.f32 %v1332, %v1336
    %v1341 = vmax.f32 %v1333, %v1337
    %v1342 = vmax.f32 %v1334, %v1338
    %v1343 = vmax.f32 %v1335, %v1339
    %v1344 = vadd.f32 %v1340, %v106
    %v1345 = vadd.f32 %v1341, %v107
    %v1346 = vadd.f32 %v1342, %v108
    %v1347 = vadd.f32 %v1343, %v109
    %v1348 = vsel %vm119, %v1344, -inf
    %1349 = vmax.xlane.f32.xlu0 %v1348
    %v1350 = vpop.xlane.xlu0 %1349
    %v1351 = vsel %vm119, %v1345, -inf
    %1352 = vmax.xlane.f32.xlu0 %v1351
    %v1353 = vpop.xlane.xlu0 %1352
    %v1354 = vsel %vm119, %v1346, -inf
    %1355 = vmax.xlane.f32.xlu0 %v1354
    %v1356 = vpop.xlane.xlu0 %1355
    %v1357 = vsel %vm119, %v1347, -inf
    %1358 = vmax.xlane.f32.xlu0 %v1357
    %v1359 = vpop.xlane.xlu0 %1358
    %v1360 = vsub.f32 %v1344, %v1350
    %v1361 = vsub.f32 %v1345, %v1353
    %v1362 = vsub.f32 %v1346, %v1356
    %v1363 = vsub.f32 %v1347, %v1359
    %v1364 = vmul.f32 %v1360, 1.442695
    %v1365 = vpow.pop %v1364
    %v1366 = vmul.f32 %v1361, 1.442695
    %v1367 = vpow.pop %v1366
    %v1368 = vmul.f32 %v1362, 1.442695
    %v1369 = vpow.pop %v1368
    %v1370 = vmul.f32 %v1363, 1.442695
    %v1371 = vpow.pop %v1370
    %v1372 = vsel %vm119, %v1365, 0.0
    %1373 = vadd.xlane.f32.xlu0 %v1372
    %v1374 = vpop.xlane.xlu0 %1373
    %v1375 = vsel %vm119, %v1367, 0.0
    %1376 = vadd.xlane.f32.xlu0 %v1375
    %v1377 = vpop.xlane.xlu0 %1376
    %v1378 = vsel %vm119, %v1369, 0.0
    %1379 = vadd.xlane.f32.xlu0 %v1378
    %v1380 = vpop.xlane.xlu0 %1379
    %v1381 = vsel %vm119, %v1371, 0.0
    %1382 = vadd.xlane.f32.xlu0 %v1381
    %v1383 = vpop.xlane.xlu0 %1382
    %v1384 = vrcp.pop %v1374
    %v1385 = vrcp.pop %v1377
    %v1386 = vrcp.pop %v1380
    %v1387 = vrcp.pop %v1383
    %v1388 = vmul.f32 %v1365, %v1384
    %v1389 = vmul.f32 %v1367, %v1385
    %v1390 = vmul.f32 %v1369, %v1386
    %v1391 = vmul.f32 %v1371, %v1387
    %v1392 = vpack.c.bf16 %v1389, %v1388
    %v1393 = vpack.c.bf16 %v1391, %v1390
    %1396 = vrot.lane.b32.xlu0 %v1255, 120
    %v1397 = vpop.permute.xlu0 %1396
    %1398 = vrot.lane.b32.xlu0 %v1256, 120
    %v1399 = vpop.permute.xlu0 %1398
    %v1403 = vsel %vm119, %v1392, 0
    %v1406 = vsel %vm119, %v1393, 0
    %1408 = vmatprep.subr.bf16.mxu0 0
    %1409 = vmatpush1.bf16.msra.mxu0 %v1397
    %1410 = vmatprep.subr.bf16.mxu0 0
    %1411 = vmatpush1.bf16.msra.mxu0 %v1399
    %1412 = vmatprep.subr.bf16.mxu0 0
    %1413 = vmatpush1.bf16.msra.mxu0 0
    %1414 = vmatprep.subr.bf16.mxu0 0
    %1415 = vmatpush1.bf16.msra.mxu0 0
    %1416 = vmatprep.subr.bf16.mxu0 0
    %1417 = vmatpush1.bf16.msra.mxu0 0
    %1418 = vmatprep.subr.bf16.mxu0 0
    %1419 = vmatpush1.bf16.msra.mxu0 0
    %1420 = vmatprep.subr.bf16.mxu0 0
    %1421 = vmatpush1.bf16.msra.mxu0 0
    %1422 = vmatprep.subr.bf16.mxu0 0
    %1423 = vmatpush1.bf16.msra.mxu0 0
    %1424 = vmatprep.subr.bf16.mxu0 0
    %1425 = vmatpush1.bf16.msra.mxu0 0
    %1426 = vmatprep.subr.bf16.mxu0 0
    %1427 = vmatpush1.bf16.msra.mxu0 0
    %1428 = vmatprep.subr.bf16.mxu0 0
    %1429 = vmatpush1.bf16.msra.mxu0 0
    %1430 = vmatprep.subr.bf16.mxu0 0
    %1431 = vmatpush1.bf16.msra.mxu0 0
    %1432 = vmatprep.subr.bf16.mxu0 0
    %1433 = vmatpush1.bf16.msra.mxu0 0
    %1434 = vmatprep.subr.bf16.mxu0 0
    %1435 = vmatpush1.bf16.msra.mxu0 0
    %1436 = vmatprep.subr.bf16.mxu0 0
    %1437 = vmatpush1.bf16.msra.mxu0 0
    %1438 = vmatprep.subr.bf16.mxu0 0
    %1439 = vmatpush1.bf16.msra.mxu0 0
    %1440 = vmatprep.mubr.bf16.mxu0 0
    %1441 = vmatmul.mubr.bf16.gmra.mrb[0].mxu0 %v1403
    %v1442 = vpop.f32.mrb[0].mxu0
    %v1443 = vadd.f32 0.0, %v1442
    %v1444 = vpop.f32.mrb[0].mxu0
    %v1445 = vpop.f32.mrb[0].mxu0
    %v1446 = vadd.f32 0.0, %v1445
    %v1447 = vpop.f32.mrb[0].mxu0
    %1448 = vmatprep.mubr.bf16.mxu0 0
    %1449 = vmatmul.mubr.bf16.gmra.mrb[0].mxu0 %v1406
    %v1450 = vpop.f32.mrb[0].mxu0
    %v1451 = vadd.f32 0.0, %v1450
    %v1452 = vpop.f32.mrb[0].mxu0
    %v1453 = vpop.f32.mrb[0].mxu0
    %v1454 = vadd.f32 0.0, %v1453
    %v1455 = vpop.f32.mrb[0].mxu0
    %1456 = vdwg.mxu0
    %1457 = vset.pattern.permute.xlu0 34
    %1458 = vperm.xlu0 %1457, %v1078
    %v1459 = vpop.permute.xlu0 %1458
    %1461 = vset.pattern.permute.xlu0 34
    %1462 = vperm.xlu0 %1461, %v1083
    %v1463 = vpop.permute.xlu0 %1462
    %1465 = vset.pattern.permute.xlu0 34
    %1466 = vperm.xlu0 %1465, %v1088
    %v1467 = vpop.permute.xlu0 %1466
    %1469 = vset.pattern.permute.xlu0 34
    %1470 = vperm.xlu0 %1469, %v1093
    %v1471 = vpop.permute.xlu0 %1470
    %v1473 = vlaneseq
    %v1474 = vshrl.u32 %v1473, 7
    %v1475 = vsub.s32 2, %v1474
    %v1476 = vrot.slane %v1166, %v1475
    %v1477 = vadd.f32 %v1459, %v1476
    %v1478 = vadd.f32 %v1463, %v1476
    %v1479 = vadd.f32 %v1467, %v1476
    %v1480 = vadd.f32 %v1471, %v1476
    %v1481 = vmul.f32 %v1477, 0.2
    %v1482 = vmul.f32 %v1478, 0.2
    %v1483 = vmul.f32 %v1479, 0.2
    %v1484 = vmul.f32 %v1480, 0.2
    %v1485 = vmax.f32 %v1477, %v1481
    %v1486 = vmax.f32 %v1478, %v1482
    %v1487 = vmax.f32 %v1479, %v1483
    %v1488 = vmax.f32 %v1480, %v1484
    %v1489 = vadd.f32 %v1485, %v106
    %v1490 = vadd.f32 %v1486, %v107
    %v1491 = vadd.f32 %v1487, %v108
    %v1492 = vadd.f32 %v1488, %v109
    %v1493 = vsel %vm119, %v1489, -inf
    %1494 = vmax.xlane.f32.xlu0 %v1493
    %v1495 = vpop.xlane.xlu0 %1494
    %v1496 = vsel %vm119, %v1490, -inf
    %1497 = vmax.xlane.f32.xlu0 %v1496
    %v1498 = vpop.xlane.xlu0 %1497
    %v1499 = vsel %vm119, %v1491, -inf
    %1500 = vmax.xlane.f32.xlu0 %v1499
    %v1501 = vpop.xlane.xlu0 %1500
    %v1502 = vsel %vm119, %v1492, -inf
    %1503 = vmax.xlane.f32.xlu0 %v1502
    %v1504 = vpop.xlane.xlu0 %1503
    %v1505 = vsub.f32 %v1489, %v1495
    %v1506 = vsub.f32 %v1490, %v1498
    %v1507 = vsub.f32 %v1491, %v1501
    %v1508 = vsub.f32 %v1492, %v1504
    %v1509 = vmul.f32 %v1505, 1.442695
    %v1510 = vpow.pop %v1509
    %v1511 = vmul.f32 %v1506, 1.442695
    %v1512 = vpow.pop %v1511
    %v1513 = vmul.f32 %v1507, 1.442695
    %v1514 = vpow.pop %v1513
    %v1515 = vmul.f32 %v1508, 1.442695
    %v1516 = vpow.pop %v1515
    %v1517 = vsel %vm119, %v1510, 0.0
    %1518 = vadd.xlane.f32.xlu0 %v1517
    %v1519 = vpop.xlane.xlu0 %1518
    %v1520 = vsel %vm119, %v1512, 0.0
    %1521 = vadd.xlane.f32.xlu0 %v1520
    %v1522 = vpop.xlane.xlu0 %1521
    %v1523 = vsel %vm119, %v1514, 0.0
    %1524 = vadd.xlane.f32.xlu0 %v1523
    %v1525 = vpop.xlane.xlu0 %1524
    %v1526 = vsel %vm119, %v1516, 0.0
    %1527 = vadd.xlane.f32.xlu0 %v1526
    %v1528 = vpop.xlane.xlu0 %1527
    %v1529 = vrcp.pop %v1519
    %v1530 = vrcp.pop %v1522
    %v1531 = vrcp.pop %v1525
    %v1532 = vrcp.pop %v1528
    %v1533 = vmul.f32 %v1510, %v1529
    %v1534 = vmul.f32 %v1512, %v1530
    %v1535 = vmul.f32 %v1514, %v1531
    %v1536 = vmul.f32 %v1516, %v1532
    %v1537 = vpack.c.bf16 %v1534, %v1533
    %v1538 = vpack.c.bf16 %v1536, %v1535
    %1539 = vrot.lane.b32.xlu0 %v1255, 112
    %v1540 = vpop.permute.xlu0 %1539
    %1541 = vrot.lane.b32.xlu0 %v1256, 112
    %v1542 = vpop.permute.xlu0 %1541
    %v1546 = vsel %vm119, %v1537, 0
    %v1549 = vsel %vm119, %v1538, 0
    %1551 = vmatprep.subr.bf16.mxu0 0
    %1552 = vmatpush1.bf16.msra.mxu0 %v1540
    %1553 = vmatprep.subr.bf16.mxu0 0
    %1554 = vmatpush1.bf16.msra.mxu0 %v1542
    %1555 = vmatprep.subr.bf16.mxu0 0
    %1556 = vmatpush1.bf16.msra.mxu0 0
    %1557 = vmatprep.subr.bf16.mxu0 0
    %1558 = vmatpush1.bf16.msra.mxu0 0
    %1559 = vmatprep.subr.bf16.mxu0 0
    %1560 = vmatpush1.bf16.msra.mxu0 0
    %1561 = vmatprep.subr.bf16.mxu0 0
    %1562 = vmatpush1.bf16.msra.mxu0 0
    %1563 = vmatprep.subr.bf16.mxu0 0
    %1564 = vmatpush1.bf16.msra.mxu0 0
    %1565 = vmatprep.subr.bf16.mxu0 0
    %1566 = vmatpush1.bf16.msra.mxu0 0
    %1567 = vmatprep.subr.bf16.mxu0 0
    %1568 = vmatpush1.bf16.msra.mxu0 0
    %1569 = vmatprep.subr.bf16.mxu0 0
    %1570 = vmatpush1.bf16.msra.mxu0 0
    %1571 = vmatprep.subr.bf16.mxu0 0
    %1572 = vmatpush1.bf16.msra.mxu0 0
    %1573 = vmatprep.subr.bf16.mxu0 0
    %1574 = vmatpush1.bf16.msra.mxu0 0
    %1575 = vmatprep.subr.bf16.mxu0 0
    %1576 = vmatpush1.bf16.msra.mxu0 0
    %1577 = vmatprep.subr.bf16.mxu0 0
    %1578 = vmatpush1.bf16.msra.mxu0 0
    %1579 = vmatprep.subr.bf16.mxu0 0
    %1580 = vmatpush1.bf16.msra.mxu0 0
    %1581 = vmatprep.subr.bf16.mxu0 0
    %1582 = vmatpush1.bf16.msra.mxu0 0
    %1583 = vmatprep.mubr.bf16.mxu0 0
    %1584 = vmatmul.mubr.bf16.gmra.mrb[0].mxu0 %v1546
    %v1585 = vpop.f32.mrb[0].mxu0
    %v1586 = vadd.f32 0.0, %v1585
    %v1587 = vpop.f32.mrb[0].mxu0
    %v1588 = vpop.f32.mrb[0].mxu0
    %v1589 = vadd.f32 0.0, %v1588
    %v1590 = vpop.f32.mrb[0].mxu0
    %1591 = vmatprep.mubr.bf16.mxu0 0
    %1592 = vmatmul.mubr.bf16.gmra.mrb[0].mxu0 %v1549
    %v1593 = vpop.f32.mrb[0].mxu0
    %v1594 = vadd.f32 0.0, %v1593
    %v1595 = vpop.f32.mrb[0].mxu0
    %v1596 = vpop.f32.mrb[0].mxu0
    %v1597 = vadd.f32 0.0, %v1596
    %v1598 = vpop.f32.mrb[0].mxu0
    %1599 = vdwg.mxu0
    %1600 = vset.pattern.permute.xlu0 35
    %1601 = vperm.xlu0 %1600, %v1078
    %v1602 = vpop.permute.xlu0 %1601
    %1604 = vset.pattern.permute.xlu0 35
    %1605 = vperm.xlu0 %1604, %v1083
    %v1606 = vpop.permute.xlu0 %1605
    %1608 = vset.pattern.permute.xlu0 35
    %1609 = vperm.xlu0 %1608, %v1088
    %v1610 = vpop.permute.xlu0 %1609
    %1612 = vset.pattern.permute.xlu0 35
    %1613 = vperm.xlu0 %1612, %v1093
    %v1614 = vpop.permute.xlu0 %1613
    %v1616 = vlaneseq
    %v1617 = vshrl.u32 %v1616, 7
    %v1618 = vsub.s32 3, %v1617
    %v1619 = vrot.slane %v1166, %v1618
    %v1620 = vadd.f32 %v1602, %v1619
    %v1621 = vadd.f32 %v1606, %v1619
    %v1622 = vadd.f32 %v1610, %v1619
    %v1623 = vadd.f32 %v1614, %v1619
    %v1624 = vmul.f32 %v1620, 0.2
    %v1625 = vmul.f32 %v1621, 0.2
    %v1626 = vmul.f32 %v1622, 0.2
    %v1627 = vmul.f32 %v1623, 0.2
    %v1628 = vmax.f32 %v1620, %v1624
    %v1629 = vmax.f32 %v1621, %v1625
    %v1630 = vmax.f32 %v1622, %v1626
    %v1631 = vmax.f32 %v1623, %v1627
    %v1632 = vadd.f32 %v1628, %v106
    %v1633 = vadd.f32 %v1629, %v107
    %v1634 = vadd.f32 %v1630, %v108
    %v1635 = vadd.f32 %v1631, %v109
    %v1636 = vsel %vm119, %v1632, -inf
    %1637 = vmax.xlane.f32.xlu0 %v1636
    %v1638 = vpop.xlane.xlu0 %1637
    %v1639 = vsel %vm119, %v1633, -inf
    %1640 = vmax.xlane.f32.xlu0 %v1639
    %v1641 = vpop.xlane.xlu0 %1640
    %v1642 = vsel %vm119, %v1634, -inf
    %1643 = vmax.xlane.f32.xlu0 %v1642
    %v1644 = vpop.xlane.xlu0 %1643
    %v1645 = vsel %vm119, %v1635, -inf
    %1646 = vmax.xlane.f32.xlu0 %v1645
    %v1647 = vpop.xlane.xlu0 %1646
    %v1648 = vsub.f32 %v1632, %v1638
    %v1649 = vsub.f32 %v1633, %v1641
    %v1650 = vsub.f32 %v1634, %v1644
    %v1651 = vsub.f32 %v1635, %v1647
    %v1652 = vmul.f32 %v1648, 1.442695
    %v1653 = vpow.pop %v1652
    %v1654 = vmul.f32 %v1649, 1.442695
    %v1655 = vpow.pop %v1654
    %v1656 = vmul.f32 %v1650, 1.442695
    %v1657 = vpow.pop %v1656
    %v1658 = vmul.f32 %v1651, 1.442695
    %v1659 = vpow.pop %v1658
    %v1660 = vsel %vm119, %v1653, 0.0
    %1661 = vadd.xlane.f32.xlu0 %v1660
    %v1662 = vpop.xlane.xlu0 %1661
    %v1663 = vsel %vm119, %v1655, 0.0
    %1664 = vadd.xlane.f32.xlu0 %v1663
    %v1665 = vpop.xlane.xlu0 %1664
    %v1666 = vsel %vm119, %v1657, 0.0
    %1667 = vadd.xlane.f32.xlu0 %v1666
    %v1668 = vpop.xlane.xlu0 %1667
    %v1669 = vsel %vm119, %v1659, 0.0
    %1670 = vadd.xlane.f32.xlu0 %v1669
    %v1671 = vpop.xlane.xlu0 %1670
    %v1672 = vrcp.pop %v1662
    %v1673 = vrcp.pop %v1665
    %v1674 = vrcp.pop %v1668
    %v1675 = vrcp.pop %v1671
    %v1676 = vmul.f32 %v1653, %v1672
    %v1677 = vmul.f32 %v1655, %v1673
    %v1678 = vmul.f32 %v1657, %v1674
    %v1679 = vmul.f32 %v1659, %v1675
    %v1680 = vpack.c.bf16 %v1677, %v1676
    %v1681 = vpack.c.bf16 %v1679, %v1678
    %1682 = vrot.lane.b32.xlu0 %v1255, 104
    %v1683 = vpop.permute.xlu0 %1682
    %1684 = vrot.lane.b32.xlu0 %v1256, 104
    %v1685 = vpop.permute.xlu0 %1684
    %v1689 = vsel %vm119, %v1680, 0
    %v1692 = vsel %vm119, %v1681, 0
    %1694 = vmatprep.subr.bf16.mxu0 0
    %1695 = vmatpush1.bf16.msra.mxu0 %v1683
    %1696 = vmatprep.subr.bf16.mxu0 0
    %1697 = vmatpush1.bf16.msra.mxu0 %v1685
    %1698 = vmatprep.subr.bf16.mxu0 0
    %1699 = vmatpush1.bf16.msra.mxu0 0
    %1700 = vmatprep.subr.bf16.mxu0 0
    %1701 = vmatpush1.bf16.msra.mxu0 0
    %1702 = vmatprep.subr.bf16.mxu0 0
    %1703 = vmatpush1.bf16.msra.mxu0 0
    %1704 = vmatprep.subr.bf16.mxu0 0
    %1705 = vmatpush1.bf16.msra.mxu0 0
    %1706 = vmatprep.subr.bf16.mxu0 0
    %1707 = vmatpush1.bf16.msra.mxu0 0
    %1708 = vmatprep.subr.bf16.mxu0 0
    %1709 = vmatpush1.bf16.msra.mxu0 0
    %1710 = vmatprep.subr.bf16.mxu0 0
    %1711 = vmatpush1.bf16.msra.mxu0 0
    %1712 = vmatprep.subr.bf16.mxu0 0
    %1713 = vmatpush1.bf16.msra.mxu0 0
    %1714 = vmatprep.subr.bf16.mxu0 0
    %1715 = vmatpush1.bf16.msra.mxu0 0
    %1716 = vmatprep.subr.bf16.mxu0 0
    %1717 = vmatpush1.bf16.msra.mxu0 0
    %1718 = vmatprep.subr.bf16.mxu0 0
    %1719 = vmatpush1.bf16.msra.mxu0 0
    %1720 = vmatprep.subr.bf16.mxu0 0
    %1721 = vmatpush1.bf16.msra.mxu0 0
    %1722 = vmatprep.subr.bf16.mxu0 0
    %1723 = vmatpush1.bf16.msra.mxu0 0
    %1724 = vmatprep.subr.bf16.mxu0 0
    %1725 = vmatpush1.bf16.msra.mxu0 0
    %1726 = vmatprep.mubr.bf16.mxu0 0
    %1727 = vmatmul.mubr.bf16.gmra.mrb[0].mxu0 %v1689
    %v1728 = vpop.f32.mrb[0].mxu0
    %v1729 = vadd.f32 0.0, %v1728
    %v1730 = vpop.f32.mrb[0].mxu0
    %v1731 = vpop.f32.mrb[0].mxu0
    %v1732 = vadd.f32 0.0, %v1731
    %v1733 = vpop.f32.mrb[0].mxu0
    %1734 = vmatprep.mubr.bf16.mxu0 0
    %1735 = vmatmul.mubr.bf16.gmra.mrb[0].mxu0 %v1692
    %v1736 = vpop.f32.mrb[0].mxu0
    %v1737 = vadd.f32 0.0, %v1736
    %v1738 = vpop.f32.mrb[0].mxu0
    %v1739 = vpop.f32.mrb[0].mxu0
    %v1740 = vadd.f32 0.0, %v1739
    %v1741 = vpop.f32.mrb[0].mxu0
    %1742 = vdwg.mxu0
    %1747 = vrot.lane.b32.xlu0 %v1443, 8
    %v1748 = vpop.permute.xlu0 %1747
    %1749 = vrot.lane.b32.xlu0 %v1446, 8
    %v1750 = vpop.permute.xlu0 %1749
    %1751 = vrot.lane.b32.xlu0 %v1451, 8
    %v1752 = vpop.permute.xlu0 %1751
    %1753 = vrot.lane.b32.xlu0 %v1454, 8
    %v1754 = vpop.permute.xlu0 %1753
    %1763 = vrot.lane.b32.xlu0 %v1586, 16
    %v1764 = vpop.permute.xlu0 %1763
    %1765 = vrot.lane.b32.xlu0 %v1589, 16
    %v1766 = vpop.permute.xlu0 %1765
    %1767 = vrot.lane.b32.xlu0 %v1594, 16
    %v1768 = vpop.permute.xlu0 %1767
    %1769 = vrot.lane.b32.xlu0 %v1597, 16
    %v1770 = vpop.permute.xlu0 %1769
    %1779 = vrot.lane.b32.xlu0 %v1729, 24
    %v1780 = vpop.permute.xlu0 %1779
    %1781 = vrot.lane.b32.xlu0 %v1732, 24
    %v1782 = vpop.permute.xlu0 %1781
    %1783 = vrot.lane.b32.xlu0 %v1737, 24
    %v1784 = vpop.permute.xlu0 %1783
    %1785 = vrot.lane.b32.xlu0 %v1740, 24
    %v1786 = vpop.permute.xlu0 %1785
    %v1791 = vsel %vm912, %v1298, %v1748
    %v1792 = vsel %vm912, %v1301, %v1750
    %v1793 = vsel %vm912, %v1306, %v1752
    %v1794 = vsel %vm912, %v1309, %v1754
    %v1795 = vsel %vm917, %v1791, %v1764
    %v1796 = vsel %vm917, %v1792, %v1766
    %v1797 = vsel %vm917, %v1793, %v1768
    %v1798 = vsel %vm917, %v1794, %v1770
    %v1799 = vsel %vm922, %v1795, %v1780
    %v1800 = vsel %vm922, %v1796, %v1782
    %v1801 = vsel %vm922, %v1797, %v1784
    %v1802 = vsel %vm922, %v1798, %v1786
    %v1803 = vsel %vm119, %v1799, 0.0
    %v1804 = vsel %vm119, %v1800, 0.0
    %v1805 = vadd.f32 %v1803, %v1804
    %v1806 = vsel %vm119, %v1801, 0.0
    %v1807 = vadd.f32 %v1805, %v1806
    %v1808 = vsel %vm119, %v1802, 0.0
    %v1809 = vadd.f32 %v1807, %v1808
    %v1810 = vrot.slane %v1809, 4
    %v1811 = vadd.f32 %v1809, %v1810
    %v1812 = vrot.slane %v1811, 2
    %v1813 = vadd.f32 %v1811, %v1812
    %v1814 = vrot.slane %v1813, 1
    %v1815 = vadd.f32 %v1813, %v1814
    %v1816 = vmul.f32 %v1815, %v940
    %v1817 = vsub.f32 %v1799, %v1816
    %v1818 = vsub.f32 %v1800, %v1816
    %v1819 = vsub.f32 %v1801, %v1816
    %v1820 = vsub.f32 %v1802, %v1816
    %v1821 = vmul.f32 %v1817, %v1817
    %v1822 = vmul.f32 %v1818, %v1818
    %v1823 = vmul.f32 %v1819, %v1819
    %v1824 = vmul.f32 %v1820, %v1820
    %v1825 = vsel %vm119, %v1821, 0.0
    %v1826 = vsel %vm119, %v1822, 0.0
    %v1827 = vadd.f32 %v1825, %v1826
    %v1828 = vsel %vm119, %v1823, 0.0
    %v1829 = vadd.f32 %v1827, %v1828
    %v1830 = vsel %vm119, %v1824, 0.0
    %v1831 = vadd.f32 %v1829, %v1830
    %v1832 = vrot.slane %v1831, 4
    %v1833 = vadd.f32 %v1831, %v1832
    %v1834 = vrot.slane %v1833, 2
    %v1835 = vadd.f32 %v1833, %v1834
    %v1836 = vrot.slane %v1835, 1
    %v1837 = vadd.f32 %v1835, %v1836
    %v1838 = vmul.f32 %v1837, %v940
    %v1839 = vadd.f32 %v1838, 1e-05
    %v1840 = vrsqrt.pop %v1839
    %v1841 = vmul.f32 %v1817, %v1840
    %v1842 = vmul.f32 %v1818, %v1840
    %v1843 = vmul.f32 %v1819, %v1840
    %v1844 = vmul.f32 %v1820, %v1840
    %vm1845 = vcmp.gt.f32.partialorder %v1841, 0.0
    %vm1846 = vcmp.gt.f32.partialorder %v1842, 0.0
    %vm1847 = vcmp.gt.f32.partialorder %v1843, 0.0
    %vm1848 = vcmp.gt.f32.partialorder %v1844, 0.0
    %v1849 = vmul.f32 %v1841, 1.442695
    %v1850 = vpow.pop %v1849
    %v1851 = vmul.f32 %v1842, 1.442695
    %v1852 = vpow.pop %v1851
    %v1853 = vmul.f32 %v1843, 1.442695
    %v1854 = vpow.pop %v1853
    %v1855 = vmul.f32 %v1844, 1.442695
    %v1856 = vpow.pop %v1855
    %v1857 = vsub.f32 %v1850, 1.0
    %v1858 = vsub.f32 %v1852, 1.0
    %v1859 = vsub.f32 %v1854, 1.0
    %v1860 = vsub.f32 %v1856, 1.0
    %v1861 = vsel %vm1845, %v1841, %v1857
    %v1862 = vsel %vm1846, %v1842, %v1858
    %v1863 = vsel %vm1847, %v1843, %v1859
    %v1864 = vsel %vm1848, %v1844, %v1860
    %v1865 = vadd.f32 %v1861, %v990
    %v1866 = vadd.f32 %v1862, %v991
    %v1867 = vadd.f32 %v1863, %v992
    %v1868 = vadd.f32 %v1864, %v993
    %v1869 = vld [vmem:[#allocation7] sm:$0xff]
    %v1870 = vld [vmem:[#allocation7 + $0x8] sm:$0xff]
    %v1871 = vld [vmem:[#allocation7 + $0x10] sm:$0xff]
    %v1872 = vld [vmem:[#allocation7 + $0x18] sm:$0xff]
    %v1873 = vld [vmem:[%s7] sm:$0x1]
    %v1875 = vlaneseq
    %v1876 = vshrl.u32 %v1875, 7
    %v1877 = vsub.s32 0, %v1876
    %v1878 = vrot.slane %v1873, %v1877
    %v1881 = vsel %vm119, %v1865, 0
    %v1884 = vsel %vm119, %v1866, 0
    %v1887 = vsel %vm119, %v1867, 0
    %v1890 = vsel %vm119, %v1868, 0
    %1892 = vmatprep.subr.mxu0 0.0
    %1893 = vmatpush1.msra.mxu0 %v1869
    %1894 = vmatprep.subr.mxu0 0.0
    %1895 = vmatpush1.msra.mxu0 %v1870
    %1896 = vmatprep.subr.mxu0 0.0
    %1897 = vmatpush1.msra.mxu0 %v1871
    %1898 = vmatprep.subr.mxu0 0.0
    %1899 = vmatpush1.msra.mxu0 %v1872
    %1900 = vmatprep.subr.mxu0 0.0
    %1901 = vmatpush1.msra.mxu0 0.0
    %1902 = vmatprep.subr.mxu0 0.0
    %1903 = vmatpush1.msra.mxu0 0.0
    %1904 = vmatprep.subr.mxu0 0.0
    %1905 = vmatpush1.msra.mxu0 0.0
    %1906 = vmatprep.subr.mxu0 0.0
    %1907 = vmatpush1.msra.mxu0 0.0
    %1908 = vmatprep.subr.mxu0 0.0
    %1909 = vmatpush1.msra.mxu0 0.0
    %1910 = vmatprep.subr.mxu0 0.0
    %1911 = vmatpush1.msra.mxu0 0.0
    %1912 = vmatprep.subr.mxu0 0.0
    %1913 = vmatpush1.msra.mxu0 0.0
    %1914 = vmatprep.subr.mxu0 0.0
    %1915 = vmatpush1.msra.mxu0 0.0
    %1916 = vmatprep.subr.mxu0 0.0
    %1917 = vmatpush1.msra.mxu0 0.0
    %1918 = vmatprep.subr.mxu0 0.0
    %1919 = vmatpush1.msra.mxu0 0.0
    %1920 = vmatprep.subr.mxu0 0.0
    %1921 = vmatpush1.msra.mxu0 0.0
    %1922 = vmatprep.subr.mxu0 0.0
    %1923 = vmatpush1.msra.mxu0 0.0
    %1924 = vmatprep.subr.mxu0 0.0
    %1925 = vmatpush1.msra.mxu0 0.0
    %1926 = vmatprep.subr.mxu0 0.0
    %1927 = vmatpush1.msra.mxu0 0.0
    %1928 = vmatprep.subr.mxu0 0.0
    %1929 = vmatpush1.msra.mxu0 0.0
    %1930 = vmatprep.subr.mxu0 0.0
    %1931 = vmatpush1.msra.mxu0 0.0
    %1932 = vmatprep.subr.mxu0 0.0
    %1933 = vmatpush1.msra.mxu0 0.0
    %1934 = vmatprep.subr.mxu0 0.0
    %1935 = vmatpush1.msra.mxu0 0.0
    %1936 = vmatprep.subr.mxu0 0.0
    %1937 = vmatpush1.msra.mxu0 0.0
    %1938 = vmatprep.subr.mxu0 0.0
    %1939 = vmatpush1.msra.mxu0 0.0
    %1940 = vmatprep.subr.mxu0 0.0
    %1941 = vmatpush1.msra.mxu0 0.0
    %1942 = vmatprep.subr.mxu0 0.0
    %1943 = vmatpush1.msra.mxu0 0.0
    %1944 = vmatprep.subr.mxu0 0.0
    %1945 = vmatpush1.msra.mxu0 0.0
    %1946 = vmatprep.subr.mxu0 0.0
    %1947 = vmatpush1.msra.mxu0 0.0
    %1948 = vmatprep.subr.mxu0 0.0
    %1949 = vmatpush1.msra.mxu0 0.0
    %1950 = vmatprep.subr.mxu0 0.0
    %1951 = vmatpush1.msra.mxu0 0.0
    %1952 = vmatprep.subr.mxu0 0.0
    %1953 = vmatpush1.msra.mxu0 0.0
    %1954 = vmatprep.subr.mxu0 0.0
    %1955 = vmatpush1.msra.mxu0 0.0
    %1956 = vmatprep.mubr.f32.mxu0 0.0
    %1957 = vmatmul.mubr.f32.gmra.mrb[0].mxu0 %v1881
    %v1958 = vpop.f32.mrb[0].mxu0
    %v1959 = vadd.f32 %v1878, %v1958
    %v1960 = vpop.f32.mrb[0].mxu0
    %1961 = vmatprep.mubr.f32.mxu0 0.0
    %1962 = vmatmul.mubr.f32.gmra.mrb[0].mxu0 %v1884
    %v1963 = vpop.f32.mrb[0].mxu0
    %v1964 = vadd.f32 %v1878, %v1963
    %v1965 = vpop.f32.mrb[0].mxu0
    %1966 = vmatprep.mubr.f32.mxu0 0.0
    %1967 = vmatmul.mubr.f32.gmra.mrb[0].mxu0 %v1887
    %v1968 = vpop.f32.mrb[0].mxu0
    %v1969 = vadd.f32 %v1878, %v1968
    %v1970 = vpop.f32.mrb[0].mxu0
    %1971 = vmatprep.mubr.f32.mxu0 0.0
    %1972 = vmatmul.mubr.f32.gmra.mrb[0].mxu0 %v1890
    %v1973 = vpop.f32.mrb[0].mxu0
    %v1974 = vadd.f32 %v1878, %v1973
    %v1975 = vpop.f32.mrb[0].mxu0
    %1976 = vdwg.mxu0
    %v1977 = vsel %vm119, %v1959, 0.0
    %v1978 = vsel %vm119, %v1964, 0.0
    %v1979 = vadd.f32 %v1977, %v1978
    %v1980 = vsel %vm119, %v1969, 0.0
    %v1981 = vadd.f32 %v1979, %v1980
    %v1982 = vsel %vm119, %v1974, 0.0
    %v1983 = vadd.f32 %v1981, %v1982
    %v1984 = vrot.slane %v1983, 4
    %v1985 = vadd.f32 %v1983, %v1984
    %v1986 = vrot.slane %v1985, 2
    %v1987 = vadd.f32 %v1985, %v1986
    %v1988 = vrot.slane %v1987, 1
    %v1989 = vadd.f32 %v1987, %v1988
    %v1990 = vmul.f32 %v1989, %v940
    %v1991 = vsub.f32 %v1959, %v1990
    %v1992 = vsub.f32 %v1964, %v1990
    %v1993 = vsub.f32 %v1969, %v1990
    %v1994 = vsub.f32 %v1974, %v1990
    %v1995 = vmul.f32 %v1991, %v1991
    %v1996 = vmul.f32 %v1992, %v1992
    %v1997 = vmul.f32 %v1993, %v1993
    %v1998 = vmul.f32 %v1994, %v1994
    %v1999 = vsel %vm119, %v1995, 0.0
    %v2000 = vsel %vm119, %v1996, 0.0
    %v2001 = vadd.f32 %v1999, %v2000
    %v2002 = vsel %vm119, %v1997, 0.0
    %v2003 = vadd.f32 %v2001, %v2002
    %v2004 = vsel %vm119, %v1998, 0.0
    %v2005 = vadd.f32 %v2003, %v2004
    %v2006 = vrot.slane %v2005, 4
    %v2007 = vadd.f32 %v2005, %v2006
    %v2008 = vrot.slane %v2007, 2
    %v2009 = vadd.f32 %v2007, %v2008
    %v2010 = vrot.slane %v2009, 1
    %v2011 = vadd.f32 %v2009, %v2010
    %v2012 = vmul.f32 %v2011, %v940
    %v2013 = vadd.f32 %v2012, 1e-05
    %v2014 = vrsqrt.pop %v2013
    %v2015 = vmul.f32 %v1991, %v2014
    %v2016 = vmul.f32 %v1992, %v2014
    %v2017 = vmul.f32 %v1993, %v2014
    %v2018 = vmul.f32 %v1994, %v2014
    %vm2019 = vcmp.gt.f32.partialorder %v2015, 0.0
    %vm2020 = vcmp.gt.f32.partialorder %v2016, 0.0
    %vm2021 = vcmp.gt.f32.partialorder %v2017, 0.0
    %vm2022 = vcmp.gt.f32.partialorder %v2018, 0.0
    %v2023 = vmul.f32 %v2015, 1.442695
    %v2024 = vpow.pop %v2023
    %v2025 = vmul.f32 %v2016, 1.442695
    %v2026 = vpow.pop %v2025
    %v2027 = vmul.f32 %v2017, 1.442695
    %v2028 = vpow.pop %v2027
    %v2029 = vmul.f32 %v2018, 1.442695
    %v2030 = vpow.pop %v2029
    %v2031 = vsub.f32 %v2024, 1.0
    %v2032 = vsub.f32 %v2026, 1.0
    %v2033 = vsub.f32 %v2028, 1.0
    %v2034 = vsub.f32 %v2030, 1.0
    %v2035 = vsel %vm2019, %v2015, %v2031
    %v2036 = vsel %vm2020, %v2016, %v2032
    %v2037 = vsel %vm2021, %v2017, %v2033
    %v2038 = vsel %vm2022, %v2018, %v2034
    %v2039 = vld [vmem:[%s8] sm:$0xff]
    %v2040 = vld [vmem:[%s8 + $0x8] sm:$0xff]
    %v2041 = vld [vmem:[%s8 + $0x10] sm:$0xff]
    %v2042 = vld [vmem:[%s8 + $0x18] sm:$0xff]
    %v2043 = vld [vmem:[%s9] sm:$0x1]
    %v2045 = vlaneseq
    %v2046 = vshrl.u32 %v2045, 7
    %v2047 = vsub.s32 0, %v2046
    %v2048 = vrot.slane %v2043, %v2047
    %v2051 = vsel %vm119, %v2035, 0
    %v2054 = vsel %vm119, %v2036, 0
    %v2057 = vsel %vm119, %v2037, 0
    %v2060 = vsel %vm119, %v2038, 0
    %2062 = vmatprep.subr.mxu0 0.0
    %2063 = vmatpush1.msra.mxu0 %v2039
    %2064 = vmatprep.subr.mxu0 0.0
    %2065 = vmatpush1.msra.mxu0 %v2040
    %2066 = vmatprep.subr.mxu0 0.0
    %2067 = vmatpush1.msra.mxu0 %v2041
    %2068 = vmatprep.subr.mxu0 0.0
    %2069 = vmatpush1.msra.mxu0 %v2042
    %2070 = vmatprep.subr.mxu0 0.0
    %2071 = vmatpush1.msra.mxu0 0.0
    %2072 = vmatprep.subr.mxu0 0.0
    %2073 = vmatpush1.msra.mxu0 0.0
    %2074 = vmatprep.subr.mxu0 0.0
    %2075 = vmatpush1.msra.mxu0 0.0
    %2076 = vmatprep.subr.mxu0 0.0
    %2077 = vmatpush1.msra.mxu0 0.0
    %2078 = vmatprep.subr.mxu0 0.0
    %2079 = vmatpush1.msra.mxu0 0.0
    %2080 = vmatprep.subr.mxu0 0.0
    %2081 = vmatpush1.msra.mxu0 0.0
    %2082 = vmatprep.subr.mxu0 0.0
    %2083 = vmatpush1.msra.mxu0 0.0
    %2084 = vmatprep.subr.mxu0 0.0
    %2085 = vmatpush1.msra.mxu0 0.0
    %2086 = vmatprep.subr.mxu0 0.0
    %2087 = vmatpush1.msra.mxu0 0.0
    %2088 = vmatprep.subr.mxu0 0.0
    %2089 = vmatpush1.msra.mxu0 0.0
    %2090 = vmatprep.subr.mxu0 0.0
    %2091 = vmatpush1.msra.mxu0 0.0
    %2092 = vmatprep.subr.mxu0 0.0
    %2093 = vmatpush1.msra.mxu0 0.0
    %2094 = vmatprep.subr.mxu0 0.0
    %2095 = vmatpush1.msra.mxu0 0.0
    %2096 = vmatprep.subr.mxu0 0.0
    %2097 = vmatpush1.msra.mxu0 0.0
    %2098 = vmatprep.subr.mxu0 0.0
    %2099 = vmatpush1.msra.mxu0 0.0
    %2100 = vmatprep.subr.mxu0 0.0
    %2101 = vmatpush1.msra.mxu0 0.0
    %2102 = vmatprep.subr.mxu0 0.0
    %2103 = vmatpush1.msra.mxu0 0.0
    %2104 = vmatprep.subr.mxu0 0.0
    %2105 = vmatpush1.msra.mxu0 0.0
    %2106 = vmatprep.subr.mxu0 0.0
    %2107 = vmatpush1.msra.mxu0 0.0
    %2108 = vmatprep.subr.mxu0 0.0
    %2109 = vmatpush1.msra.mxu0 0.0
    %2110 = vmatprep.subr.mxu0 0.0
    %2111 = vmatpush1.msra.mxu0 0.0
    %2112 = vmatprep.subr.mxu0 0.0
    %2113 = vmatpush1.msra.mxu0 0.0
    %2114 = vmatprep.subr.mxu0 0.0
    %2115 = vmatpush1.msra.mxu0 0.0
    %2116 = vmatprep.subr.mxu0 0.0
    %2117 = vmatpush1.msra.mxu0 0.0
    %2118 = vmatprep.subr.mxu0 0.0
    %2119 = vmatpush1.msra.mxu0 0.0
    %2120 = vmatprep.subr.mxu0 0.0
    %2121 = vmatpush1.msra.mxu0 0.0
    %2122 = vmatprep.subr.mxu0 0.0
    %2123 = vmatpush1.msra.mxu0 0.0
    %2124 = vmatprep.subr.mxu0 0.0
    %2125 = vmatpush1.msra.mxu0 0.0
    %2126 = vmatprep.mubr.f32.mxu0 0.0
    %2127 = vmatmul.mubr.f32.gmra.mrb[0].mxu0 %v2051
    %v2128 = vpop.f32.mrb[0].mxu0
    %v2129 = vadd.f32 %v2048, %v2128
    %v2130 = vpop.f32.mrb[0].mxu0
    %2131 = vmatprep.mubr.f32.mxu0 0.0
    %2132 = vmatmul.mubr.f32.gmra.mrb[0].mxu0 %v2054
    %v2133 = vpop.f32.mrb[0].mxu0
    %v2134 = vadd.f32 %v2048, %v2133
    %v2135 = vpop.f32.mrb[0].mxu0
    %2136 = vmatprep.mubr.f32.mxu0 0.0
    %2137 = vmatmul.mubr.f32.gmra.mrb[0].mxu0 %v2057
    %v2138 = vpop.f32.mrb[0].mxu0
    %v2139 = vadd.f32 %v2048, %v2138
    %v2140 = vpop.f32.mrb[0].mxu0
    %2141 = vmatprep.mubr.f32.mxu0 0.0
    %2142 = vmatmul.mubr.f32.gmra.mrb[0].mxu0 %v2060
    %v2143 = vpop.f32.mrb[0].mxu0
    %v2144 = vadd.f32 %v2048, %v2143
    %v2145 = vpop.f32.mrb[0].mxu0
    %2146 = vdwg.mxu0
    %v2147 = vsel %vm917, %v2129, 0.0
    %v2148 = vsel %vm917, %v2134, 0.0
    %v2149 = vadd.f32 %v2147, %v2148
    %v2150 = vsel %vm917, %v2139, 0.0
    %v2151 = vadd.f32 %v2149, %v2150
    %v2152 = vsel %vm917, %v2144, 0.0
    %v2153 = vadd.f32 %v2151, %v2152
    %v2154 = vrot.slane %v2153, 4
    %v2155 = vadd.f32 %v2153, %v2154
    %v2156 = vrot.slane %v2155, 2
    %v2157 = vadd.f32 %v2155, %v2156
    %v2158 = vrot.slane %v2157, 1
    %v2159 = vadd.f32 %v2157, %v2158
    %v2160 = vmul.f32 %v2159, %v940
    %v2161 = vsub.f32 %v2129, %v2160
    %v2162 = vsub.f32 %v2134, %v2160
    %v2163 = vsub.f32 %v2139, %v2160
    %v2164 = vsub.f32 %v2144, %v2160
    %v2165 = vmul.f32 %v2161, %v2161
    %v2166 = vmul.f32 %v2162, %v2162
    %v2167 = vmul.f32 %v2163, %v2163
    %v2168 = vmul.f32 %v2164, %v2164
    %v2169 = vsel %vm917, %v2165, 0.0
    %v2170 = vsel %vm917, %v2166, 0.0
    %v2171 = vadd.f32 %v2169, %v2170
    %v2172 = vsel %vm917, %v2167, 0.0
    %v2173 = vadd.f32 %v2171, %v2172
    %v2174 = vsel %vm917, %v2168, 0.0
    %v2175 = vadd.f32 %v2173, %v2174
    %v2176 = vrot.slane %v2175, 4
    %v2177 = vadd.f32 %v2175, %v2176
    %v2178 = vrot.slane %v2177, 2
    %v2179 = vadd.f32 %v2177, %v2178
    %v2180 = vrot.slane %v2179, 1
    %v2181 = vadd.f32 %v2179, %v2180
    %v2182 = vmul.f32 %v2181, %v940
    %v2183 = vadd.f32 %v2182, 1e-05
    %v2184 = vrsqrt.pop %v2183
    %v2185 = vmul.f32 %v2161, %v2184
    %v2186 = vmul.f32 %v2162, %v2184
    %v2187 = vmul.f32 %v2163, %v2184
    %v2188 = vmul.f32 %v2164, %v2184
    %vm2189 = vcmp.gt.f32.partialorder %v2185, 0.0
    %vm2190 = vcmp.gt.f32.partialorder %v2186, 0.0
    %vm2191 = vcmp.gt.f32.partialorder %v2187, 0.0
    %vm2192 = vcmp.gt.f32.partialorder %v2188, 0.0
    %v2193 = vmul.f32 %v2185, 1.442695
    %v2194 = vpow.pop %v2193
    %v2195 = vmul.f32 %v2186, 1.442695
    %v2196 = vpow.pop %v2195
    %v2197 = vmul.f32 %v2187, 1.442695
    %v2198 = vpow.pop %v2197
    %v2199 = vmul.f32 %v2188, 1.442695
    %v2200 = vpow.pop %v2199
    %v2201 = vsub.f32 %v2194, 1.0
    %v2202 = vsub.f32 %v2196, 1.0
    %v2203 = vsub.f32 %v2198, 1.0
    %v2204 = vsub.f32 %v2200, 1.0
    %v2205 = vsel %vm2189, %v2185, %v2201
    %v2206 = vsel %vm2190, %v2186, %v2202
    %v2207 = vsel %vm2191, %v2187, %v2203
    %v2208 = vsel %vm2192, %v2188, %v2204
    %v2209 = vld [vmem:[%s10] sm:$0xff]
    %v2210 = vld [vmem:[%s10 + $0x8] sm:$0xff]
    %v2211 = vld [vmem:[%s11] sm:$0x1]
    %v2213 = vlaneseq
    %v2214 = vshrl.u32 %v2213, 7
    %v2215 = vsub.s32 0, %v2214
    %v2216 = vrot.slane %v2211, %v2215
    %v2219 = vsel %vm917, %v2205, 0
    %v2222 = vsel %vm917, %v2206, 0
    %v2225 = vsel %vm917, %v2207, 0
    %v2228 = vsel %vm917, %v2208, 0
    %2230 = vmatprep.subr.mxu0 0.0
    %2231 = vmatpush1.msra.mxu0 %v2209
    %2232 = vmatprep.subr.mxu0 0.0
    %2233 = vmatpush1.msra.mxu0 %v2210
    %2234 = vmatprep.subr.mxu0 0.0
    %2235 = vmatpush1.msra.mxu0 0.0
    %2236 = vmatprep.subr.mxu0 0.0
    %2237 = vmatpush1.msra.mxu0 0.0
    %2238 = vmatprep.subr.mxu0 0.0
    %2239 = vmatpush1.msra.mxu0 0.0
    %2240 = vmatprep.subr.mxu0 0.0
    %2241 = vmatpush1.msra.mxu0 0.0
    %2242 = vmatprep.subr.mxu0 0.0
    %2243 = vmatpush1.msra.mxu0 0.0
    %2244 = vmatprep.subr.mxu0 0.0
    %2245 = vmatpush1.msra.mxu0 0.0
    %2246 = vmatprep.subr.mxu0 0.0
    %2247 = vmatpush1.msra.mxu0 0.0
    %2248 = vmatprep.subr.mxu0 0.0
    %2249 = vmatpush1.msra.mxu0 0.0
    %2250 = vmatprep.subr.mxu0 0.0
    %2251 = vmatpush1.msra.mxu0 0.0
    %2252 = vmatprep.subr.mxu0 0.0
    %2253 = vmatpush1.msra.mxu0 0.0
    %2254 = vmatprep.subr.mxu0 0.0
    %2255 = vmatpush1.msra.mxu0 0.0
    %2256 = vmatprep.subr.mxu0 0.0
    %2257 = vmatpush1.msra.mxu0 0.0
    %2258 = vmatprep.subr.mxu0 0.0
    %2259 = vmatpush1.msra.mxu0 0.0
    %2260 = vmatprep.subr.mxu0 0.0
    %2261 = vmatpush1.msra.mxu0 0.0
    %2262 = vmatprep.subr.mxu0 0.0
    %2263 = vmatpush1.msra.mxu0 0.0
    %2264 = vmatprep.subr.mxu0 0.0
    %2265 = vmatpush1.msra.mxu0 0.0
    %2266 = vmatprep.subr.mxu0 0.0
    %2267 = vmatpush1.msra.mxu0 0.0
    %2268 = vmatprep.subr.mxu0 0.0
    %2269 = vmatpush1.msra.mxu0 0.0
    %2270 = vmatprep.subr.mxu0 0.0
    %2271 = vmatpush1.msra.mxu0 0.0
    %2272 = vmatprep.subr.mxu0 0.0
    %2273 = vmatpush1.msra.mxu0 0.0
    %2274 = vmatprep.subr.mxu0 0.0
    %2275 = vmatpush1.msra.mxu0 0.0
    %2276 = vmatprep.subr.mxu0 0.0
    %2277 = vmatpush1.msra.mxu0 0.0
    %2278 = vmatprep.subr.mxu0 0.0
    %2279 = vmatpush1.msra.mxu0 0.0
    %2280 = vmatprep.subr.mxu0 0.0
    %2281 = vmatpush1.msra.mxu0 0.0
    %2282 = vmatprep.subr.mxu0 0.0
    %2283 = vmatpush1.msra.mxu0 0.0
    %2284 = vmatprep.subr.mxu0 0.0
    %2285 = vmatpush1.msra.mxu0 0.0
    %2286 = vmatprep.subr.mxu0 0.0
    %2287 = vmatpush1.msra.mxu0 0.0
    %2288 = vmatprep.subr.mxu0 0.0
    %2289 = vmatpush1.msra.mxu0 0.0
    %2290 = vmatprep.subr.mxu0 0.0
    %2291 = vmatpush1.msra.mxu0 0.0
    %2292 = vmatprep.subr.mxu0 0.0
    %2293 = vmatpush1.msra.mxu0 0.0
    %2294 = vmatprep.mubr.f32.mxu0 0.0
    %2295 = vmatmul.mubr.f32.gmra.mrb[0].mxu0 %v2219
    %v2296 = vpop.f32.mrb[0].mxu0
    %v2297 = vadd.f32 %v2216, %v2296
    %v2298 = vpop.f32.mrb[0].mxu0
    %2299 = vmatprep.mubr.f32.mxu0 0.0
    %2300 = vmatmul.mubr.f32.gmra.mrb[0].mxu0 %v2222
    %v2301 = vpop.f32.mrb[0].mxu0
    %v2302 = vadd.f32 %v2216, %v2301
    %v2303 = vpop.f32.mrb[0].mxu0
    %2304 = vmatprep.mubr.f32.mxu0 0.0
    %2305 = vmatmul.mubr.f32.gmra.mrb[0].mxu0 %v2225
    %v2306 = vpop.f32.mrb[0].mxu0
    %v2307 = vadd.f32 %v2216, %v2306
    %v2308 = vpop.f32.mrb[0].mxu0
    %2309 = vmatprep.mubr.f32.mxu0 0.0
    %2310 = vmatmul.mubr.f32.gmra.mrb[0].mxu0 %v2228
    %v2311 = vpop.f32.mrb[0].mxu0
    %v2312 = vadd.f32 %v2216, %v2311
    %v2313 = vpop.f32.mrb[0].mxu0
    %2314 = vdwg.mxu0
    %vm2315 = vcmask 31744
    %2316 = vst.msk [vmem:[%s12] sm:$0xff] %vm2315, %v2297
    %2317 = vst.msk [vmem:[%s12 + $0x8] sm:$0xff] %vm2315, %v2302
    %2318 = vst.msk [vmem:[%s12 + $0x10] sm:$0xff] %vm2315, %v2307
    %2319 = vst.msk [vmem:[%s12 + $0x18] sm:$0xff] %vm2315, %v2312
    // Predicated region
    $region66: #{tpu_custom_call.1} parent=1 // pred_check
      _
    $region67: #{tpu_custom_call.1} parent=1 // pred_check_branch
      %2321 = sbr.rel (0) target = $region69
    $region68: #{tpu_custom_call.1} parent=1 // pred_region
      _
    $region69: #{tpu_custom_call.1} parent=1 // pred_fallthru
      _
    // Predicated region
    $region70: #{tpu_custom_call.1} parent=1 // pred_check
      _
    $region71: #{tpu_custom_call.1} parent=1 // pred_check_branch
      %2323 = sbr.rel (0) target = $region73
    $region72: #{tpu_custom_call.1} parent=1 // pred_region
      _
    $region73: #{tpu_custom_call.1} parent=1 // pred_fallthru
      _
    %2324 = vsyncpa [#allocation3], 1
    %2325 = vsyncpa [#allocation5], 1
    %2326 = vsyncpa [#allocation8], 1

</llo_original>
